<compile_context>
chip_gen: v6e
topology: v6e:2x2x1
jax: 0.10.0
libtpu: 0.0.40
codegen_flags: <defaults>
</compile_context>

<pallas_src>
import math
from functools import partial

import jax
import jax.numpy as jnp
from jax.experimental import pallas as pl
from jax.experimental.pallas import tpu as pltpu

_SUBLANE = 8


# --------------------------------------------------------------------------- #
# Shape helpers
# --------------------------------------------------------------------------- #
def _padded_dims(seq_len, cf):
    """(valid compressed len, 8-aligned compressed len, padded seq len)."""
    sc_valid = pl.cdiv(seq_len, cf)
    sc = ((sc_valid + _SUBLANE - 1) // _SUBLANE) * _SUBLANE
    return sc_valid, sc, sc * cf


def _vmem_capacity_bytes():
    try:
        cap = getattr(pltpu.get_tpu_info(), "vmem_capacity_bytes", None)
        if cap:
            return int(cap)
    except Exception:
        pass
    kind = ""
    try:
        kind = jax.devices()[0].device_kind.lower()
    except Exception:
        pass
    # v5e / v6e: 128 MiB per core; v7x: 64 MiB per TensorCore.
    return (64 if "7" in kind else 128) * 1024 * 1024


def _vmem_estimate(b_tile, tq, s_pad, sc, d_in, d_out, cf):
    """Rough per-grid-step VMEM footprint in bytes (worst case, dual view)."""
    bf, f = 2, 4
    x_in = 2 * b_tile * s_pad * d_in * bf                 # input tile (double buffered)
    xc_in = 2 * b_tile * sc * cf * d_in * bf               # dual-view fallback worst case
    out_t = 2 * b_tile * s_pad * d_out * f                 # f32 output tile (double buffered)
    wgt = (d_in * d_out + 2 * cf * d_in * d_out + d_out * d_out) * bf \
        + (sc * 2 * d_out + 2 * d_out) * f
    scr = (b_tile * s_pad * d_out + 2 * b_tile * sc * d_out) * bf
    trans = b_tile * (s_pad * d_out + sc * 2 * d_out) * f \
        + 3 * b_tile * tq * sc * f + 2 * b_tile * tq * d_out * f
    return x_in + xc_in + out_t + wgt + scr + trans


def _select_tiles(B, s_pad, sc, d_in, d_out, cf, budget):
    # Cap b_tile at B//2 so the batch grid has >= 2 steps (both v7x TCs busy).
    cap_b = B if B == 1 else max(1, B // 2)
    tq_candidates = [t for t in (1024, 512, 256, 128, 64, 32, 16, 8) if t <= s_pad]
    if not tq_candidates:
        tq_candidates = [s_pad]
    for bt in range(cap_b, 0, -1):
        if B % bt:
            continue
        for tq in tq_candidates:
            if _vmem_estimate(bt, tq, s_pad, sc, d_in, d_out, cf) <= budget:
                return bt, tq
    return 1, tq_candidates[-1]


# --------------------------------------------------------------------------- #
# Kernel
# --------------------------------------------------------------------------- #
def _cmha_kernel(*refs, b_tile, sc, sc_valid, s_pad, cf, d_in, d_out, tq,
                 causal, dual_view):
    if dual_view:
        (x_ref, xc_ref, wq_ref, bq_ref, wkv_ref, bkv_ref,
         wout_ref, bout_ref, out_ref, q_scr, k_scr, v_scr) = refs
    else:
        (x_ref, wq_ref, bq_ref, wkv_ref, bkv_ref,
         wout_ref, bout_ref, out_ref, q_scr, k_scr, v_scr) = refs
        xc_ref = None
    f32, bf16 = jnp.float32, jnp.bfloat16

    # ---- Q projection: one matmul over all b_tile*s_pad rows ---------------
    # (1/sqrt(dh) already folded into wq / bq host-side.)
    q2 = jnp.dot(x_ref[...], wq_ref[...], preferred_element_type=f32) + bq_ref[...]
    q_scr[...] = q2.reshape(b_tile, s_pad, d_out).astype(bf16)   # s_pad % 8 == 0

    # ---- fused K/V projection + Conv1d(k=cf, stride=cf) compression --------
    if dual_view:
        # Fallback path: grouped [b_tile*sc, cf*d_in] view shipped separately.
        kv = jnp.dot(xc_ref[...], wkv_ref[...], preferred_element_type=f32)
    else:
        # Single-view path: cf strided-row matmuls over the one x tile.
        rows = b_tile * sc
        kv = jnp.dot(x_ref[pl.ds(0, rows, stride=cf), :], wkv_ref[0:d_in, :],
                     preferred_element_type=f32)
        for j in range(1, cf):
            xj = x_ref[pl.ds(j, rows, stride=cf), :]
            wj = wkv_ref[j * d_in:(j + 1) * d_in, :]
            kv = kv + jnp.dot(xj, wj, preferred_element_type=f32)

    # per-compressed-row bias broadcast across the batch tile (sc % 8 == 0)
    kv3 = (kv.reshape(b_tile, sc, 2 * d_out) + bkv_ref[...][None, :, :]).astype(bf16)
    k_scr[...] = kv3[:, :, :d_out]
    v_scr[...] = kv3[:, :, d_out:]

    # ---- attention + out_proj, tiled over the query dimension --------------
    def q_tile(start):
        q_t = q_scr[:, pl.ds(start, tq), :]                    # [b_tile, tq, d_out]
        s = jnp.einsum('bqd,bkd->bqk', q_t, k_scr[...],
                       preferred_element_type=f32)             # [b_tile, tq, sc]
        if causal or sc > sc_valid:
            row = start + jax.lax.broadcasted_iota(jnp.int32, (tq, sc), 0)
            col = jax.lax.broadcasted_iota(jnp.int32, (tq, sc), 1)
            keep = col < sc_valid                              # padded key columns
            if causal:
                keep = keep & (col <= row)                     # tril(ones(Sq, Sk))
            s = jnp.where(keep[None, :, :], s, -1e30)          # finite mask: NaN-safe
        m = jnp.max(s, axis=-1, keepdims=True)
        p = jnp.exp(s - m)
        # EUP approximate reciprocal; use approx=False if exact f32 softmax needed.
        p = p * pl.reciprocal(jnp.sum(p, axis=-1, keepdims=True), approx=True)
        attn = jnp.einsum('bqk,bkd->bqd', p.astype(bf16), v_scr[...],
                          preferred_element_type=f32)
        # out_proj hoisted to one matmul over all b_tile*tq rows of this tile.
        o = jnp.dot(attn.reshape(b_tile * tq, d_out).astype(bf16), wout_ref[...],
                    preferred_element_type=f32) + bout_ref[...]
        out_ref[:, pl.ds(start, tq), :] = o.reshape(b_tile, tq, d_out)

    n_qt = pl.cdiv(s_pad, tq)
    if n_qt == 1:
        q_tile(0)
    else:
        def body(t, carry):
            # clamp keeps the last tile full-size; starts stay multiples of 8
            q_tile(pl.multiple_of(jnp.minimum(t * tq, s_pad - tq), 8))
            return carry
        jax.lax.fori_loop(0, n_qt, body, 0)


# --------------------------------------------------------------------------- #
# pallas_call builder + wrapper
# --------------------------------------------------------------------------- #
def _build_call(B, d_in, d_out, cf, sc_valid, sc, s_pad, b_tile, tq,
                causal, dual_view, single_buffer, consts, vmem_limit):
    def const_spec(arr):
        kw = dict(pipeline_mode=pl.Buffered(1)) if single_buffer else {}
        return pl.BlockSpec(arr.shape, lambda g, _nd=arr.ndim: (0,) * _nd, **kw)

    in_specs = [pl.BlockSpec((b_tile * s_pad, d_in), lambda g: (g, 0))]
    if dual_view:
        in_specs.append(pl.BlockSpec((b_tile * sc, cf * d_in), lambda g: (g, 0)))
    in_specs += [const_spec(a) for a in consts]

    kern = partial(_cmha_kernel, b_tile=b_tile, sc=sc, sc_valid=sc_valid,
                   s_pad=s_pad, cf=cf, d_in=d_in, d_out=d_out, tq=tq,
                   causal=causal, dual_view=dual_view)

    return pl.pallas_call(
        kern,
        out_shape=jax.ShapeDtypeStruct((B, s_pad, d_out), jnp.float32),
        grid=(B // b_tile,),
        in_specs=in_specs,
        out_specs=pl.BlockSpec((b_tile, s_pad, d_out), lambda g: (g, 0, 0)),
        scratch_shapes=[pltpu.VMEM((b_tile, s_pad, d_out), jnp.bfloat16),  # q
                        pltpu.VMEM((b_tile, sc, d_out), jnp.bfloat16),     # k
                        pltpu.VMEM((b_tile, sc, d_out), jnp.bfloat16)],    # v
        compiler_params=pltpu.CompilerParams(
            dimension_semantics=("parallel",),
            vmem_limit_bytes=int(vmem_limit)),
    )


def prepare_params(raw_params, *, seq_len, num_heads, cf):
    """Fold Conv1d compression + attention scale into the weights (host-side)."""
    Wqkv, bqkv, Wck, bck, Wcv, bcv, Wout, bout = raw_params
    d_out = Wqkv.shape[0] // 3
    d_in = Wqkv.shape[1]
    dh = d_out // num_heads
    scale = 1.0 / math.sqrt(dh)
    _, sc, _ = _padded_dims(seq_len, cf)

    Wq, Wk, Wv = Wqkv[:d_out], Wqkv[d_out:2 * d_out], Wqkv[2 * d_out:]
    bq, bk, bv = bqkv[:d_out], bqkv[d_out:2 * d_out], bqkv[2 * d_out:]

    def fuse(Wc, bc, Wl, bl):
        # fused weight: [cf*d_in, d_out], row index = tap_j * d_in + in_dim_i
        wf = jnp.einsum('ocj,ci->jio', Wc, Wl).reshape(cf * d_in, d_out)
        # per-compressed-row bias: only taps that exist (< seq_len) contribute
        tap_bias = jnp.einsum('ocj,c->jo', Wc, bl)               # [cf, d_out]
        cum = jnp.cumsum(tap_bias, axis=0)
        valid = jnp.clip(seq_len - jnp.arange(sc) * cf, 1, cf)   # padded rows: harmless
        b_rows = bc[None, :] + cum[valid - 1]                    # [sc, d_out]
        return wf, b_rows

    wk_f, bk_rows = fuse(Wck, bck, Wk, bk)
    wv_f, bv_rows = fuse(Wcv, bcv, Wv, bv)
    wkv = jnp.concatenate([wk_f, wv_f], axis=1).astype(jnp.bfloat16)     # [cf*d_in, 2*d_out]
    bkv = jnp.concatenate([bk_rows, bv_rows], axis=1).astype(jnp.float32)  # [sc, 2*d_out]

    return (
        (Wq * scale).T.astype(jnp.bfloat16),
        (bq * scale).reshape(1, -1).astype(jnp.float32),
        wkv, bkv,
        Wout.T.astype(jnp.bfloat16),
        bout.reshape(1, -1).astype(jnp.float32),
    )


_PREFERRED = []   # remembered working (dual_view, single_buffer) config


def compressed_mha_pallas(x, params, *, num_heads, cf, mask):
    assert num_heads == 1, (
        "reference out_proj (Linear(d_out, d_out) on per-head width) only "
        "type-checks for num_heads == 1")
    B, S, d_in = x.shape
    wq, bq, wkv, bkv, wout, bout = params
    d_out = wq.shape[1]
    sc_valid, sc, s_pad = _padded_dims(S, cf)
    assert bkv.shape[0] == sc, "params were prepared for a different seq_len"

    # bf16 activations; pad the sequence so the compressed length is a multiple
    # of 8 (padded key columns are masked in-kernel, padded query rows dropped).
    xb = x.astype(jnp.bfloat16)
    if s_pad > S:
        xb = jnp.pad(xb, ((0, 0), (0, s_pad - S), (0, 0)))
    x2d = xb.reshape(B * s_pad, d_in)

    cap = _vmem_capacity_bytes()
    budget = (3 * cap) // 4                       # ~96 MiB v5e/v6e, ~48 MiB v7x
    vmem_limit = min(budget + (8 << 20), cap - (8 << 20))
    b_tile, tq = _select_tiles(B, s_pad, sc, d_in, d_out, cf, budget)

    consts = (wq, bq, wkv, bkv, wout, bout)
    # config = (dual_view, single_buffered_constants); try the most optimized
    # configuration first, fall back gracefully if a feature is unsupported.
    configs = list(_PREFERRED) + [c for c in
                                  ((False, True), (False, False),
                                   (True, True), (True, False))
                                  if c not in _PREFERRED]
    xc2d = None
    last_err = None
    for dual_view, single_buffer in configs:
        try:
            call = _build_call(B, d_in, d_out, cf, sc_valid, sc, s_pad, b_tile,
                               tq, bool(mask), dual_view, single_buffer, consts,
                               vmem_limit)
            if dual_view:
                if xc2d is None:
                    xc2d = xb.reshape(B * sc, cf * d_in)
                out = call(x2d, xc2d, *consts)
            else:
                out = call(x2d, *consts)
            out = jax.block_until_ready(out)
            if not _PREFERRED or _PREFERRED[0] != (dual_view, single_buffer):
                _PREFERRED[:] = [(dual_view, single_buffer)]
            return out[:, :S, :] if s_pad > S else out
        except Exception as err:   # fall through to the next configuration
            last_err = err
    raise last_err


# --------------------------------------------------------------------------- #
# Pure-JAX f32 reference (verification only)
# --------------------------------------------------------------------------- #
def reference_forward(x, raw_params, num_heads, cf, mask):
    Wqkv, bqkv, Wck, bck, Wcv, bcv, Wout, bout = raw_params
    B, S, _ = x.shape
    d_out = Wqkv.shape[0] // 3

    qkv = x @ Wqkv.T + bqkv
    q, k, v = qkv[..., :d_out], qkv[..., d_out:2 * d_out], qkv[..., 2 * d_out:]

    def compress(t, W, b):
        pad = (-S) % cf
        t = jnp.pad(t, ((0, 0), (0, pad), (0, 0)))
        tr = t.reshape(B, -1, cf, d_out)                    # [B, Sc, tap, in_ch]
        return jnp.einsum('btji,oij->bto', tr, W) + b       # Conv1d(k=cf, stride=cf)

    kc, vc = compress(k, Wck, bck), compress(v, Wcv, bcv)

    dh = d_out // num_heads

    def split(t):
        return t.reshape(B, t.shape[1], num_heads, dh).transpose(0, 2, 1, 3)

    qh, kh, vh = split(q), split(kc), split(vc)
    scores = jnp.einsum('bhqd,bhkd->bhqk', qh, kh) / math.sqrt(dh)
    if mask:
        Sq, Sk = scores.shape[-2], scores.shape[-1]
        tril = jnp.tril(jnp.ones((Sq, Sk), bool))
        scores = jnp.where(tril, scores, -jnp.inf)
    p = jax.nn.softmax(scores, axis=-1)
    attn = jnp.einsum('bhqk,bhkd->bhqd', p, vh)
    o = attn @ Wout.T + bout                                # per-head out_proj
    return o.transpose(0, 2, 1, 3).reshape(B, S, -1)


if __name__ == "__main__":
    key = jax.random.PRNGKey(0)
    d_in, d_out, num_heads, cf = 32, 32, 1, 4
    keys = jax.random.split(key, 9)

    def u(k, shape, fan_in):
        lim = 1.0 / math.sqrt(fan_in)
        return jax.random.uniform(k, shape, jnp.float32, -lim, lim)

    # PyTorch-layout parameters (deterministic synthetic init)
    Wqkv = u(keys[0], (3 * d_out, d_in), d_in)              # Linear(d_in, 3*d_out)
    bqkv = u(keys[1], (3 * d_out,), d_in)
    Wck = u(keys[2], (d_out, d_out, cf), d_out * cf)        # Conv1d weight [oc, ic, k]
    bck = u(keys[3], (d_out,), d_out * cf)
    Wcv = u(keys[4], (d_out, d_out, cf), d_out * cf)
    bcv = u(keys[5], (d_out,), d_out * cf)
    Wout = u(keys[6], (d_out, d_out), d_out)                # Linear(d_out, d_out)
    bout = u(keys[7], (d_out,), d_out)
    raw_params = (Wqkv, bqkv, Wck, bck, Wcv, bcv, Wout, bout)

    # second (B, S) exercises the zero-padded tail (S % cf != 0) path
    for B, S in ((2, 16), (2, 13)):
        x = jax.random.normal(jax.random.fold_in(keys[8], S), (B, S, d_in), jnp.float32)
        params = prepare_params(raw_params, seq_len=S, num_heads=num_heads, cf=cf)
        for mask in (True, False):
            out = compressed_mha_pallas(x, params, num_heads=num_heads, cf=cf, mask=mask)
            out = jax.block_until_ready(out)
            ref = reference_forward(x, raw_params, num_heads, cf, mask)
            assert out.shape == ref.shape == (B, S, num_heads * d_out)
            err = float(jnp.max(jnp.abs(out - ref)))
            # bf16 matmul operands + approx reciprocal => loose-ish tolerance
            assert jnp.allclose(out, ref, rtol=2e-2, atol=2e-2), \
                f"mismatch (S={S}, mask={mask}): max_abs_err={err}"

    print("KERNEL_OK")
</pallas_src>

<mosaic_0001>
module attributes {stable_mosaic.version = 11 : i64} {
  func.func @_cmha_kernel(%arg0: i32, %arg1: memref<32x32xbf16, #tpu.memory_space<vmem>>, %arg2: memref<32x32xbf16, #tpu.memory_space<vmem>>, %arg3: memref<1x32xf32, #tpu.memory_space<vmem>>, %arg4: memref<128x64xbf16, #tpu.memory_space<vmem>>, %arg5: memref<8x64xf32, #tpu.memory_space<vmem>>, %arg6: memref<32x32xbf16, #tpu.memory_space<vmem>>, %arg7: memref<1x32xf32, #tpu.memory_space<vmem>>, %arg8: memref<1x32x32xf32, #tpu.memory_space<vmem>>, %arg9: memref<1x32x32xbf16, #tpu.memory_space<vmem>>, %arg10: memref<1x8x32xbf16, #tpu.memory_space<vmem>>, %arg11: memref<1x8x32xbf16, #tpu.memory_space<vmem>>) attributes {dimension_semantics = [#tpu.dimension_semantics<parallel>], iteration_bounds = array<i64: 2>, scalar_prefetch = 0 : i64, scratch_operands = 3 : i64, tpu.core_type = #tpu.core_type<tc>, window_params = [{transform_indices = @transform_0, window_bounds = array<i64: 32, 32>}, {pipeline_mode = #tpu.pipeline_mode<synchronous>, transform_indices = @transform_1, window_bounds = array<i64: 32, 32>}, {pipeline_mode = #tpu.pipeline_mode<synchronous>, transform_indices = @transform_2, window_bounds = array<i64: 1, 32>}, {pipeline_mode = #tpu.pipeline_mode<synchronous>, transform_indices = @transform_3, window_bounds = array<i64: 128, 64>}, {pipeline_mode = #tpu.pipeline_mode<synchronous>, transform_indices = @transform_4, window_bounds = array<i64: 8, 64>}, {pipeline_mode = #tpu.pipeline_mode<synchronous>, transform_indices = @transform_5, window_bounds = array<i64: 32, 32>}, {pipeline_mode = #tpu.pipeline_mode<synchronous>, transform_indices = @transform_6, window_bounds = array<i64: 1, 32>}, {transform_indices = @transform_7, window_bounds = array<i64: 1, 32, 32>}]} {
    %c0 = arith.constant 0 : index
    %c0_0 = arith.constant 0 : index
    %0 = vector.load %arg1[%c0, %c0_0] : memref<32x32xbf16, #tpu.memory_space<vmem>>, vector<32x32xbf16>
    %c0_1 = arith.constant 0 : index
    %c0_2 = arith.constant 0 : index
    %1 = vector.load %arg2[%c0_1, %c0_2] : memref<32x32xbf16, #tpu.memory_space<vmem>>, vector<32x32xbf16>
    %cst = arith.constant dense<0.000000e+00> : vector<32x32xf32>
    %2 = tpu.matmul %0, %1, %cst {dimension_numbers = #tpu.dot_dimension_numbers<[1], [0], [0], [1], [0, 0, 1, 1], [], []>} : vector<32x32xbf16>, vector<32x32xbf16>, vector<32x32xf32> -> vector<32x32xf32>
    %c0_3 = arith.constant 0 : index
    %c0_4 = arith.constant 0 : index
    %3 = vector.load %arg3[%c0_3, %c0_4] : memref<1x32xf32, #tpu.memory_space<vmem>>, vector<1x32xf32>
    %4 = vector.broadcast %3 : vector<1x32xf32> to vector<32x32xf32>
    %5 = arith.addf %2, %4 : vector<32x32xf32>
    %6 = vector.shape_cast %5 : vector<32x32xf32> to vector<1x32x32xf32>
    %7 = arith.truncf %6 : vector<1x32x32xf32> to vector<1x32x32xbf16>
    %c0_5 = arith.constant 0 : index
    %c0_6 = arith.constant 0 : index
    %c0_7 = arith.constant 0 : index
    %8 = vector.load %arg9[%c0_5, %c0_6, %c0_7] : memref<1x32x32xbf16, #tpu.memory_space<vmem>>, vector<1x32x32xbf16>
    tpu.vector_store %arg9[%c0_5, %c0_6, %c0_7], %7 {strides = array<i32>} : memref<1x32x32xbf16, #tpu.memory_space<vmem>>, vector<1x32x32xbf16>,
    %c0_8 = arith.constant 0 : index
    %c0_9 = arith.constant 0 : index
    %9 = tpu.strided_load %arg1[%c0_8, %c0_9] {strides = array<i32: 4, 1>} : memref<32x32xbf16, #tpu.memory_space<vmem>>, vector<8x32xbf16>
    %c0_10 = arith.constant 0 : index
    %c0_11 = arith.constant 0 : index
    %10 = vector.load %arg4[%c0_10, %c0_11] : memref<128x64xbf16, #tpu.memory_space<vmem>>, vector<32x64xbf16>
    %cst_12 = arith.constant dense<0.000000e+00> : vector<8x64xf32>
    %11 = tpu.matmul %9, %10, %cst_12 {dimension_numbers = #tpu.dot_dimension_numbers<[1], [0], [0], [1], [0, 0, 1, 1], [], []>} : vector<8x32xbf16>, vector<32x64xbf16>, vector<8x64xf32> -> vector<8x64xf32>
    %c1 = arith.constant 1 : index
    %c0_13 = arith.constant 0 : index
    %12 = tpu.strided_load %arg1[%c1, %c0_13] {strides = array<i32: 4, 1>} : memref<32x32xbf16, #tpu.memory_space<vmem>>, vector<8x32xbf16>
    %c32 = arith.constant 32 : index
    %c0_14 = arith.constant 0 : index
    %13 = vector.load %arg4[%c32, %c0_14] : memref<128x64xbf16, #tpu.memory_space<vmem>>, vector<32x64xbf16>
    %cst_15 = arith.constant dense<0.000000e+00> : vector<8x64xf32>
    %14 = tpu.matmul %12, %13, %cst_15 {dimension_numbers = #tpu.dot_dimension_numbers<[1], [0], [0], [1], [0, 0, 1, 1], [], []>} : vector<8x32xbf16>, vector<32x64xbf16>, vector<8x64xf32> -> vector<8x64xf32>
    %15 = arith.addf %11, %14 : vector<8x64xf32>
    %c2 = arith.constant 2 : index
    %c0_16 = arith.constant 0 : index
    %16 = tpu.strided_load %arg1[%c2, %c0_16] {strides = array<i32: 4, 1>} : memref<32x32xbf16, #tpu.memory_space<vmem>>, vector<8x32xbf16>
    %c64 = arith.constant 64 : index
    %c0_17 = arith.constant 0 : index
    %17 = vector.load %arg4[%c64, %c0_17] : memref<128x64xbf16, #tpu.memory_space<vmem>>, vector<32x64xbf16>
    %cst_18 = arith.constant dense<0.000000e+00> : vector<8x64xf32>
    %18 = tpu.matmul %16, %17, %cst_18 {dimension_numbers = #tpu.dot_dimension_numbers<[1], [0], [0], [1], [0, 0, 1, 1], [], []>} : vector<8x32xbf16>, vector<32x64xbf16>, vector<8x64xf32> -> vector<8x64xf32>
    %19 = arith.addf %15, %18 : vector<8x64xf32>
    %c3 = arith.constant 3 : index
    %c0_19 = arith.constant 0 : index
    %20 = tpu.strided_load %arg1[%c3, %c0_19] {strides = array<i32: 4, 1>} : memref<32x32xbf16, #tpu.memory_space<vmem>>, vector<8x32xbf16>
    %c96 = arith.constant 96 : index
    %c0_20 = arith.constant 0 : index
    %21 = vector.load %arg4[%c96, %c0_20] : memref<128x64xbf16, #tpu.memory_space<vmem>>, vector<32x64xbf16>
    %cst_21 = arith.constant dense<0.000000e+00> : vector<8x64xf32>
    %22 = tpu.matmul %20, %21, %cst_21 {dimension_numbers = #tpu.dot_dimension_numbers<[1], [0], [0], [1], [0, 0, 1, 1], [], []>} : vector<8x32xbf16>, vector<32x64xbf16>, vector<8x64xf32> -> vector<8x64xf32>
    %23 = arith.addf %19, %22 : vector<8x64xf32>
    %24 = vector.shape_cast %23 : vector<8x64xf32> to vector<1x8x64xf32>
    %c0_22 = arith.constant 0 : index
    %c0_23 = arith.constant 0 : index
    %25 = vector.load %arg5[%c0_22, %c0_23] : memref<8x64xf32, #tpu.memory_space<vmem>>, vector<8x64xf32>
    %26 = vector.shape_cast %25 : vector<8x64xf32> to vector<1x8x64xf32>
    %27 = arith.addf %24, %26 : vector<1x8x64xf32>
    %28 = arith.truncf %27 : vector<1x8x64xf32> to vector<1x8x64xbf16>
    %29 = vector.extract_strided_slice %28 {offsets = [0, 0, 0], sizes = [1, 8, 32], strides = [1, 1, 1]} : vector<1x8x64xbf16> to vector<1x8x32xbf16>
    %c0_24 = arith.constant 0 : index
    %c0_25 = arith.constant 0 : index
    %c0_26 = arith.constant 0 : index
    %30 = vector.load %arg10[%c0_24, %c0_25, %c0_26] : memref<1x8x32xbf16, #tpu.memory_space<vmem>>, vector<1x8x32xbf16>
    tpu.vector_store %arg10[%c0_24, %c0_25, %c0_26], %29 {strides = array<i32>} : memref<1x8x32xbf16, #tpu.memory_space<vmem>>, vector<1x8x32xbf16>,
    %31 = vector.extract_strided_slice %28 {offsets = [0, 0, 32], sizes = [1, 8, 32], strides = [1, 1, 1]} : vector<1x8x64xbf16> to vector<1x8x32xbf16>
    %c0_27 = arith.constant 0 : index
    %c0_28 = arith.constant 0 : index
    %c0_29 = arith.constant 0 : index
    %32 = vector.load %arg11[%c0_27, %c0_28, %c0_29] : memref<1x8x32xbf16, #tpu.memory_space<vmem>>, vector<1x8x32xbf16>
    tpu.vector_store %arg11[%c0_27, %c0_28, %c0_29], %31 {strides = array<i32>} : memref<1x8x32xbf16, #tpu.memory_space<vmem>>, vector<1x8x32xbf16>,
    %c0_30 = arith.constant 0 : index
    %c0_31 = arith.constant 0 : index
    %c0_32 = arith.constant 0 : index
    %33 = vector.load %arg9[%c0_30, %c0_31, %c0_32] : memref<1x32x32xbf16, #tpu.memory_space<vmem>>, vector<1x32x32xbf16>
    %c0_33 = arith.constant 0 : index
    %c0_34 = arith.constant 0 : index
    %c0_35 = arith.constant 0 : index
    %34 = vector.load %arg10[%c0_33, %c0_34, %c0_35] : memref<1x8x32xbf16, #tpu.memory_space<vmem>>, vector<1x8x32xbf16>
    "tpu.trace_start"() <{level = 10 : i32, message = "bqd,bkd->bqk"}> : () -> ()
    %cst_36 = arith.constant dense<0.000000e+00> : vector<1x32x8xf32>
    %35 = tpu.matmul %33, %34, %cst_36 {dimension_numbers = #tpu.dot_dimension_numbers<[2], [2], [1], [1], [0, 0, 0, 1, 1, 1], [0], [0]>} : vector<1x32x32xbf16>, vector<1x8x32xbf16>, vector<1x32x8xf32> -> vector<1x32x8xf32>
    "tpu.trace_stop"() : () -> ()
    %36 = tpu.iota {dimensions = array<i32: 0>} : vector<32x8xi32>
    %c0_i32 = arith.constant 0 : i32
    %37 = vector.broadcast %c0_i32 : i32 to vector<32x8xi32>
    %38 = arith.addi %37, %36 : vector<32x8xi32>
    %39 = tpu.iota {dimensions = array<i32: 1>} : vector<32x8xi32>
    %c4_i32 = arith.constant 4 : i32
    %40 = vector.broadcast %c4_i32 : i32 to vector<32x8xi32>
    %41 = arith.cmpi slt, %39, %40 : vector<32x8xi32>
    %42 = arith.cmpi sle, %39, %38 : vector<32x8xi32>
    %43 = arith.andi %41, %42 : vector<32x8xi1>
    %44 = vector.shape_cast %43 : vector<32x8xi1> to vector<1x32x8xi1>
    %cst_37 = arith.constant -1.000000e+30 : f32
    %45 = vector.broadcast %cst_37 : f32 to vector<1x32x8xf32>
    %46 = arith.select %44, %35, %45 : vector<1x32x8xi1>, vector<1x32x8xf32>
    %cst_38 = arith.constant dense<0xFF800000> : vector<1x32xf32>
    %47 = vector.multi_reduction <maximumf>, %46, %cst_38 [2] : vector<1x32x8xf32> to vector<1x32xf32>
    %48 = vector.shape_cast %47 : vector<1x32xf32> to vector<1x32x1xf32>
    %49 = vector.broadcast %48 : vector<1x32x1xf32> to vector<1x32x8xf32>
    %50 = arith.subf %46, %49 : vector<1x32x8xf32>
    %51 = math.exp %50 : vector<1x32x8xf32>
    %cst_39 = arith.constant dense<0.000000e+00> : vector<1x32xf32>
    %52 = vector.multi_reduction <add>, %51, %cst_39 [2] : vector<1x32x8xf32> to vector<1x32xf32>
    %53 = vector.shape_cast %52 : vector<1x32xf32> to vector<1x32x1xf32>
    %54 = tpu.reciprocal %53 {approx = true} : vector<1x32x1xf32> -> vector<1x32x1xf32>
    %55 = vector.broadcast %54 : vector<1x32x1xf32> to vector<1x32x8xf32>
    %56 = arith.mulf %51, %55 : vector<1x32x8xf32>
    %57 = arith.truncf %56 : vector<1x32x8xf32> to vector<1x32x8xbf16>
    %c0_40 = arith.constant 0 : index
    %c0_41 = arith.constant 0 : index
    %c0_42 = arith.constant 0 : index
    %58 = vector.load %arg11[%c0_40, %c0_41, %c0_42] : memref<1x8x32xbf16, #tpu.memory_space<vmem>>, vector<1x8x32xbf16>
    "tpu.trace_start"() <{level = 10 : i32, message = "bqk,bkd->bqd"}> : () -> ()
    %cst_43 = arith.constant dense<0.000000e+00> : vector<1x32x32xf32>
    %59 = tpu.matmul %57, %58, %cst_43 {dimension_numbers = #tpu.dot_dimension_numbers<[2], [1], [1], [2], [0, 0, 0, 1, 1, 2], [0], [0]>} : vector<1x32x8xbf16>, vector<1x8x32xbf16>, vector<1x32x32xf32> -> vector<1x32x32xf32>
    "tpu.trace_stop"() : () -> ()
    %60 = vector.shape_cast %59 : vector<1x32x32xf32> to vector<32x32xf32>
    %61 = arith.truncf %60 : vector<32x32xf32> to vector<32x32xbf16>
    %c0_44 = arith.constant 0 : index
    %c0_45 = arith.constant 0 : index
    %62 = vector.load %arg6[%c0_44, %c0_45] : memref<32x32xbf16, #tpu.memory_space<vmem>>, vector<32x32xbf16>
    %cst_46 = arith.constant dense<0.000000e+00> : vector<32x32xf32>
    %63 = tpu.matmul %61, %62, %cst_46 {dimension_numbers = #tpu.dot_dimension_numbers<[1], [0], [0], [1], [0, 0, 1, 1], [], []>} : vector<32x32xbf16>, vector<32x32xbf16>, vector<32x32xf32> -> vector<32x32xf32>
    %c0_47 = arith.constant 0 : index
    %c0_48 = arith.constant 0 : index
    %64 = vector.load %arg7[%c0_47, %c0_48] : memref<1x32xf32, #tpu.memory_space<vmem>>, vector<1x32xf32>
    %65 = vector.broadcast %64 : vector<1x32xf32> to vector<32x32xf32>
    %66 = arith.addf %63, %65 : vector<32x32xf32>
    %67 = vector.shape_cast %66 : vector<32x32xf32> to vector<1x32x32xf32>
    %c0_49 = arith.constant 0 : index
    %c0_50 = arith.constant 0 : index
    %c0_51 = arith.constant 0 : index
    %68 = vector.load %arg8[%c0_49, %c0_50, %c0_51] : memref<1x32x32xf32, #tpu.memory_space<vmem>>, vector<1x32x32xf32>
    tpu.vector_store %arg8[%c0_49, %c0_50, %c0_51], %67 {strides = array<i32>} : memref<1x32x32xf32, #tpu.memory_space<vmem>>, vector<1x32x32xf32>,
    return
  }
  func.func @transform_0(%arg0: i32) -> (i32, i32) {
    %c0_i32 = arith.constant 0 : i32
    %c0_i32_0 = arith.constant 0 : i32
    return %arg0, %c0_i32 : i32, i32
  }
  func.func @transform_1(%arg0: i32) -> (i32, i32) {
    %c0_i32 = arith.constant 0 : i32
    %c0_i32_0 = arith.constant 0 : i32
    %c0_i32_1 = arith.constant 0 : i32
    return %c0_i32, %c0_i32_0 : i32, i32
  }
  func.func @transform_2(%arg0: i32) -> (i32, i32) {
    %c0_i32 = arith.constant 0 : i32
    %c0_i32_0 = arith.constant 0 : i32
    %c0_i32_1 = arith.constant 0 : i32
    return %c0_i32, %c0_i32_0 : i32, i32
  }
  func.func @transform_3(%arg0: i32) -> (i32, i32) {
    %c0_i32 = arith.constant 0 : i32
    %c0_i32_0 = arith.constant 0 : i32
    %c0_i32_1 = arith.constant 0 : i32
    return %c0_i32, %c0_i32_0 : i32, i32
  }
  func.func @transform_4(%arg0: i32) -> (i32, i32) {
    %c0_i32 = arith.constant 0 : i32
    %c0_i32_0 = arith.constant 0 : i32
    %c0_i32_1 = arith.constant 0 : i32
    return %c0_i32, %c0_i32_0 : i32, i32
  }
  func.func @transform_5(%arg0: i32) -> (i32, i32) {
    %c0_i32 = arith.constant 0 : i32
    %c0_i32_0 = arith.constant 0 : i32
    %c0_i32_1 = arith.constant 0 : i32
    return %c0_i32, %c0_i32_0 : i32, i32
  }
  func.func @transform_6(%arg0: i32) -> (i32, i32) {
    %c0_i32 = arith.constant 0 : i32
    %c0_i32_0 = arith.constant 0 : i32
    %c0_i32_1 = arith.constant 0 : i32
    return %c0_i32, %c0_i32_0 : i32, i32
  }
  func.func @transform_7(%arg0: i32) -> (i32, i32, i32) {
    %c0_i32 = arith.constant 0 : i32
    %c0_i32_0 = arith.constant 0 : i32
    %c0_i32_1 = arith.constant 0 : i32
    return %arg0, %c0_i32, %c0_i32_0 : i32, i32, i32
  }
}

module attributes {stable_mosaic.version = 11 : i64} {
  func.func @_cmha_kernel(%arg0: i32, %arg1: memref<32x32xbf16, #tpu.memory_space<vmem>>, %arg2: memref<32x32xbf16, #tpu.memory_space<vmem>>, %arg3: memref<1x32xf32, #tpu.memory_space<vmem>>, %arg4: memref<128x64xbf16, #tpu.memory_space<vmem>>, %arg5: memref<8x64xf32, #tpu.memory_space<vmem>>, %arg6: memref<32x32xbf16, #tpu.memory_space<vmem>>, %arg7: memref<1x32xf32, #tpu.memory_space<vmem>>, %arg8: memref<1x32x32xf32, #tpu.memory_space<vmem>>, %arg9: memref<1x32x32xbf16, #tpu.memory_space<vmem>>, %arg10: memref<1x8x32xbf16, #tpu.memory_space<vmem>>, %arg11: memref<1x8x32xbf16, #tpu.memory_space<vmem>>) attributes {dimension_semantics = [#tpu.dimension_semantics<parallel>], iteration_bounds = array<i64: 2>, scalar_prefetch = 0 : i64, scratch_operands = 3 : i64, tpu.core_type = #tpu.core_type<tc>, window_params = [{transform_indices = @transform_0, window_bounds = array<i64: 32, 32>}, {pipeline_mode = #tpu.pipeline_mode<synchronous>, transform_indices = @transform_1, window_bounds = array<i64: 32, 32>}, {pipeline_mode = #tpu.pipeline_mode<synchronous>, transform_indices = @transform_2, window_bounds = array<i64: 1, 32>}, {pipeline_mode = #tpu.pipeline_mode<synchronous>, transform_indices = @transform_3, window_bounds = array<i64: 128, 64>}, {pipeline_mode = #tpu.pipeline_mode<synchronous>, transform_indices = @transform_4, window_bounds = array<i64: 8, 64>}, {pipeline_mode = #tpu.pipeline_mode<synchronous>, transform_indices = @transform_5, window_bounds = array<i64: 32, 32>}, {pipeline_mode = #tpu.pipeline_mode<synchronous>, transform_indices = @transform_6, window_bounds = array<i64: 1, 32>}, {transform_indices = @transform_7, window_bounds = array<i64: 1, 32, 32>}]} {
    %c0 = arith.constant 0 : index
    %c0_0 = arith.constant 0 : index
    %0 = vector.load %arg1[%c0, %c0_0] : memref<32x32xbf16, #tpu.memory_space<vmem>>, vector<32x32xbf16>
    %c0_1 = arith.constant 0 : index
    %c0_2 = arith.constant 0 : index
    %1 = vector.load %arg2[%c0_1, %c0_2] : memref<32x32xbf16, #tpu.memory_space<vmem>>, vector<32x32xbf16>
    %cst = arith.constant dense<0.000000e+00> : vector<32x32xf32>
    %2 = tpu.matmul %0, %1, %cst {dimension_numbers = #tpu.dot_dimension_numbers<[1], [0], [0], [1], [0, 0, 1, 1], [], []>} : vector<32x32xbf16>, vector<32x32xbf16>, vector<32x32xf32> -> vector<32x32xf32>
    %c0_3 = arith.constant 0 : index
    %c0_4 = arith.constant 0 : index
    %3 = vector.load %arg3[%c0_3, %c0_4] : memref<1x32xf32, #tpu.memory_space<vmem>>, vector<1x32xf32>
    %4 = vector.broadcast %3 : vector<1x32xf32> to vector<32x32xf32>
    %5 = arith.addf %2, %4 : vector<32x32xf32>
    %6 = vector.shape_cast %5 : vector<32x32xf32> to vector<1x32x32xf32>
    %7 = arith.truncf %6 : vector<1x32x32xf32> to vector<1x32x32xbf16>
    %c0_5 = arith.constant 0 : index
    %c0_6 = arith.constant 0 : index
    %c0_7 = arith.constant 0 : index
    %8 = vector.load %arg9[%c0_5, %c0_6, %c0_7] : memref<1x32x32xbf16, #tpu.memory_space<vmem>>, vector<1x32x32xbf16>
    tpu.vector_store %arg9[%c0_5, %c0_6, %c0_7], %7 {strides = array<i32>} : memref<1x32x32xbf16, #tpu.memory_space<vmem>>, vector<1x32x32xbf16>,
    %c0_8 = arith.constant 0 : index
    %c0_9 = arith.constant 0 : index
    %9 = tpu.strided_load %arg1[%c0_8, %c0_9] {strides = array<i32: 4, 1>} : memref<32x32xbf16, #tpu.memory_space<vmem>>, vector<8x32xbf16>
    %c0_10 = arith.constant 0 : index
    %c0_11 = arith.constant 0 : index
    %10 = vector.load %arg4[%c0_10, %c0_11] : memref<128x64xbf16, #tpu.memory_space<vmem>>, vector<32x64xbf16>
    %cst_12 = arith.constant dense<0.000000e+00> : vector<8x64xf32>
    %11 = tpu.matmul %9, %10, %cst_12 {dimension_numbers = #tpu.dot_dimension_numbers<[1], [0], [0], [1], [0, 0, 1, 1], [], []>} : vector<8x32xbf16>, vector<32x64xbf16>, vector<8x64xf32> -> vector<8x64xf32>
    %c1 = arith.constant 1 : index
    %c0_13 = arith.constant 0 : index
    %12 = tpu.strided_load %arg1[%c1, %c0_13] {strides = array<i32: 4, 1>} : memref<32x32xbf16, #tpu.memory_space<vmem>>, vector<8x32xbf16>
    %c32 = arith.constant 32 : index
    %c0_14 = arith.constant 0 : index
    %13 = vector.load %arg4[%c32, %c0_14] : memref<128x64xbf16, #tpu.memory_space<vmem>>, vector<32x64xbf16>
    %cst_15 = arith.constant dense<0.000000e+00> : vector<8x64xf32>
    %14 = tpu.matmul %12, %13, %cst_15 {dimension_numbers = #tpu.dot_dimension_numbers<[1], [0], [0], [1], [0, 0, 1, 1], [], []>} : vector<8x32xbf16>, vector<32x64xbf16>, vector<8x64xf32> -> vector<8x64xf32>
    %15 = arith.addf %11, %14 : vector<8x64xf32>
    %c2 = arith.constant 2 : index
    %c0_16 = arith.constant 0 : index
    %16 = tpu.strided_load %arg1[%c2, %c0_16] {strides = array<i32: 4, 1>} : memref<32x32xbf16, #tpu.memory_space<vmem>>, vector<8x32xbf16>
    %c64 = arith.constant 64 : index
    %c0_17 = arith.constant 0 : index
    %17 = vector.load %arg4[%c64, %c0_17] : memref<128x64xbf16, #tpu.memory_space<vmem>>, vector<32x64xbf16>
    %cst_18 = arith.constant dense<0.000000e+00> : vector<8x64xf32>
    %18 = tpu.matmul %16, %17, %cst_18 {dimension_numbers = #tpu.dot_dimension_numbers<[1], [0], [0], [1], [0, 0, 1, 1], [], []>} : vector<8x32xbf16>, vector<32x64xbf16>, vector<8x64xf32> -> vector<8x64xf32>
    %19 = arith.addf %15, %18 : vector<8x64xf32>
    %c3 = arith.constant 3 : index
    %c0_19 = arith.constant 0 : index
    %20 = tpu.strided_load %arg1[%c3, %c0_19] {strides = array<i32: 4, 1>} : memref<32x32xbf16, #tpu.memory_space<vmem>>, vector<8x32xbf16>
    %c96 = arith.constant 96 : index
    %c0_20 = arith.constant 0 : index
    %21 = vector.load %arg4[%c96, %c0_20] : memref<128x64xbf16, #tpu.memory_space<vmem>>, vector<32x64xbf16>
    %cst_21 = arith.constant dense<0.000000e+00> : vector<8x64xf32>
    %22 = tpu.matmul %20, %21, %cst_21 {dimension_numbers = #tpu.dot_dimension_numbers<[1], [0], [0], [1], [0, 0, 1, 1], [], []>} : vector<8x32xbf16>, vector<32x64xbf16>, vector<8x64xf32> -> vector<8x64xf32>
    %23 = arith.addf %19, %22 : vector<8x64xf32>
    %24 = vector.shape_cast %23 : vector<8x64xf32> to vector<1x8x64xf32>
    %c0_22 = arith.constant 0 : index
    %c0_23 = arith.constant 0 : index
    %25 = vector.load %arg5[%c0_22, %c0_23] : memref<8x64xf32, #tpu.memory_space<vmem>>, vector<8x64xf32>
    %26 = vector.shape_cast %25 : vector<8x64xf32> to vector<1x8x64xf32>
    %27 = arith.addf %24, %26 : vector<1x8x64xf32>
    %28 = arith.truncf %27 : vector<1x8x64xf32> to vector<1x8x64xbf16>
    %29 = vector.extract_strided_slice %28 {offsets = [0, 0, 0], sizes = [1, 8, 32], strides = [1, 1, 1]} : vector<1x8x64xbf16> to vector<1x8x32xbf16>
    %c0_24 = arith.constant 0 : index
    %c0_25 = arith.constant 0 : index
    %c0_26 = arith.constant 0 : index
    %30 = vector.load %arg10[%c0_24, %c0_25, %c0_26] : memref<1x8x32xbf16, #tpu.memory_space<vmem>>, vector<1x8x32xbf16>
    tpu.vector_store %arg10[%c0_24, %c0_25, %c0_26], %29 {strides = array<i32>} : memref<1x8x32xbf16, #tpu.memory_space<vmem>>, vector<1x8x32xbf16>,
    %31 = vector.extract_strided_slice %28 {offsets = [0, 0, 32], sizes = [1, 8, 32], strides = [1, 1, 1]} : vector<1x8x64xbf16> to vector<1x8x32xbf16>
    %c0_27 = arith.constant 0 : index
    %c0_28 = arith.constant 0 : index
    %c0_29 = arith.constant 0 : index
    %32 = vector.load %arg11[%c0_27, %c0_28, %c0_29] : memref<1x8x32xbf16, #tpu.memory_space<vmem>>, vector<1x8x32xbf16>
    tpu.vector_store %arg11[%c0_27, %c0_28, %c0_29], %31 {strides = array<i32>} : memref<1x8x32xbf16, #tpu.memory_space<vmem>>, vector<1x8x32xbf16>,
    %c0_30 = arith.constant 0 : index
    %c0_31 = arith.constant 0 : index
    %c0_32 = arith.constant 0 : index
    %33 = vector.load %arg9[%c0_30, %c0_31, %c0_32] : memref<1x32x32xbf16, #tpu.memory_space<vmem>>, vector<1x32x32xbf16>
    %c0_33 = arith.constant 0 : index
    %c0_34 = arith.constant 0 : index
    %c0_35 = arith.constant 0 : index
    %34 = vector.load %arg10[%c0_33, %c0_34, %c0_35] : memref<1x8x32xbf16, #tpu.memory_space<vmem>>, vector<1x8x32xbf16>
    "tpu.trace_start"() <{level = 10 : i32, message = "bqd,bkd->bqk"}> : () -> ()
    %cst_36 = arith.constant dense<0.000000e+00> : vector<1x32x8xf32>
    %35 = tpu.matmul %33, %34, %cst_36 {dimension_numbers = #tpu.dot_dimension_numbers<[2], [2], [1], [1], [0, 0, 0, 1, 1, 1], [0], [0]>} : vector<1x32x32xbf16>, vector<1x8x32xbf16>, vector<1x32x8xf32> -> vector<1x32x8xf32>
    "tpu.trace_stop"() : () -> ()
    %36 = tpu.iota {dimensions = array<i32: 0>} : vector<32x8xi32>
    %c0_i32 = arith.constant 0 : i32
    %37 = vector.broadcast %c0_i32 : i32 to vector<32x8xi32>
    %38 = arith.addi %37, %36 : vector<32x8xi32>
    %39 = tpu.iota {dimensions = array<i32: 1>} : vector<32x8xi32>
    %c4_i32 = arith.constant 4 : i32
    %40 = vector.broadcast %c4_i32 : i32 to vector<32x8xi32>
    %41 = arith.cmpi slt, %39, %40 : vector<32x8xi32>
    %42 = arith.cmpi sle, %39, %38 : vector<32x8xi32>
    %43 = arith.andi %41, %42 : vector<32x8xi1>
    %44 = vector.shape_cast %43 : vector<32x8xi1> to vector<1x32x8xi1>
    %cst_37 = arith.constant -1.000000e+30 : f32
    %45 = vector.broadcast %cst_37 : f32 to vector<1x32x8xf32>
    %46 = arith.select %44, %35, %45 : vector<1x32x8xi1>, vector<1x32x8xf32>
    %cst_38 = arith.constant dense<0xFF800000> : vector<1x32xf32>
    %47 = vector.multi_reduction <maximumf>, %46, %cst_38 [2] : vector<1x32x8xf32> to vector<1x32xf32>
    %48 = vector.shape_cast %47 : vector<1x32xf32> to vector<1x32x1xf32>
    %49 = vector.broadcast %48 : vector<1x32x1xf32> to vector<1x32x8xf32>
    %50 = arith.subf %46, %49 : vector<1x32x8xf32>
    %51 = math.exp %50 : vector<1x32x8xf32>
    %cst_39 = arith.constant dense<0.000000e+00> : vector<1x32xf32>
    %52 = vector.multi_reduction <add>, %51, %cst_39 [2] : vector<1x32x8xf32> to vector<1x32xf32>
    %53 = vector.shape_cast %52 : vector<1x32xf32> to vector<1x32x1xf32>
    %54 = tpu.reciprocal %53 {approx = true} : vector<1x32x1xf32> -> vector<1x32x1xf32>
    %55 = vector.broadcast %54 : vector<1x32x1xf32> to vector<1x32x8xf32>
    %56 = arith.mulf %51, %55 : vector<1x32x8xf32>
    %57 = arith.truncf %56 : vector<1x32x8xf32> to vector<1x32x8xbf16>
    %c0_40 = arith.constant 0 : index
    %c0_41 = arith.constant 0 : index
    %c0_42 = arith.constant 0 : index
    %58 = vector.load %arg11[%c0_40, %c0_41, %c0_42] : memref<1x8x32xbf16, #tpu.memory_space<vmem>>, vector<1x8x32xbf16>
    "tpu.trace_start"() <{level = 10 : i32, message = "bqk,bkd->bqd"}> : () -> ()
    %cst_43 = arith.constant dense<0.000000e+00> : vector<1x32x32xf32>
    %59 = tpu.matmul %57, %58, %cst_43 {dimension_numbers = #tpu.dot_dimension_numbers<[2], [1], [1], [2], [0, 0, 0, 1, 1, 2], [0], [0]>} : vector<1x32x8xbf16>, vector<1x8x32xbf16>, vector<1x32x32xf32> -> vector<1x32x32xf32>
    "tpu.trace_stop"() : () -> ()
    %60 = vector.shape_cast %59 : vector<1x32x32xf32> to vector<32x32xf32>
    %61 = arith.truncf %60 : vector<32x32xf32> to vector<32x32xbf16>
    %c0_44 = arith.constant 0 : index
    %c0_45 = arith.constant 0 : index
    %62 = vector.load %arg6[%c0_44, %c0_45] : memref<32x32xbf16, #tpu.memory_space<vmem>>, vector<32x32xbf16>
    %cst_46 = arith.constant dense<0.000000e+00> : vector<32x32xf32>
    %63 = tpu.matmul %61, %62, %cst_46 {dimension_numbers = #tpu.dot_dimension_numbers<[1], [0], [0], [1], [0, 0, 1, 1], [], []>} : vector<32x32xbf16>, vector<32x32xbf16>, vector<32x32xf32> -> vector<32x32xf32>
    %c0_47 = arith.constant 0 : index
    %c0_48 = arith.constant 0 : index
    %64 = vector.load %arg7[%c0_47, %c0_48] : memref<1x32xf32, #tpu.memory_space<vmem>>, vector<1x32xf32>
    %65 = vector.broadcast %64 : vector<1x32xf32> to vector<32x32xf32>
    %66 = arith.addf %63, %65 : vector<32x32xf32>
    %67 = vector.shape_cast %66 : vector<32x32xf32> to vector<1x32x32xf32>
    %c0_49 = arith.constant 0 : index
    %c0_50 = arith.constant 0 : index
    %c0_51 = arith.constant 0 : index
    %68 = vector.load %arg8[%c0_49, %c0_50, %c0_51] : memref<1x32x32xf32, #tpu.memory_space<vmem>>, vector<1x32x32xf32>
    tpu.vector_store %arg8[%c0_49, %c0_50, %c0_51], %67 {strides = array<i32>} : memref<1x32x32xf32, #tpu.memory_space<vmem>>, vector<1x32x32xf32>,
    return
  }
  func.func @transform_0(%arg0: i32) -> (i32, i32) {
    %c0_i32 = arith.constant 0 : i32
    %c0_i32_0 = arith.constant 0 : i32
    return %arg0, %c0_i32 : i32, i32
  }
  func.func @transform_1(%arg0: i32) -> (i32, i32) {
    %c0_i32 = arith.constant 0 : i32
    %c0_i32_0 = arith.constant 0 : i32
    %c0_i32_1 = arith.constant 0 : i32
    return %c0_i32, %c0_i32_0 : i32, i32
  }
  func.func @transform_2(%arg0: i32) -> (i32, i32) {
    %c0_i32 = arith.constant 0 : i32
    %c0_i32_0 = arith.constant 0 : i32
    %c0_i32_1 = arith.constant 0 : i32
    return %c0_i32, %c0_i32_0 : i32, i32
  }
  func.func @transform_3(%arg0: i32) -> (i32, i32) {
    %c0_i32 = arith.constant 0 : i32
    %c0_i32_0 = arith.constant 0 : i32
    %c0_i32_1 = arith.constant 0 : i32
    return %c0_i32, %c0_i32_0 : i32, i32
  }
  func.func @transform_4(%arg0: i32) -> (i32, i32) {
    %c0_i32 = arith.constant 0 : i32
    %c0_i32_0 = arith.constant 0 : i32
    %c0_i32_1 = arith.constant 0 : i32
    return %c0_i32, %c0_i32_0 : i32, i32
  }
  func.func @transform_5(%arg0: i32) -> (i32, i32) {
    %c0_i32 = arith.constant 0 : i32
    %c0_i32_0 = arith.constant 0 : i32
    %c0_i32_1 = arith.constant 0 : i32
    return %c0_i32, %c0_i32_0 : i32, i32
  }
  func.func @transform_6(%arg0: i32) -> (i32, i32) {
    %c0_i32 = arith.constant 0 : i32
    %c0_i32_0 = arith.constant 0 : i32
    %c0_i32_1 = arith.constant 0 : i32
    return %c0_i32, %c0_i32_0 : i32, i32
  }
  func.func @transform_7(%arg0: i32) -> (i32, i32, i32) {
    %c0_i32 = arith.constant 0 : i32
    %c0_i32_0 = arith.constant 0 : i32
    %c0_i32_1 = arith.constant 0 : i32
    return %arg0, %c0_i32, %c0_i32_0 : i32, i32, i32
  }
}

module attributes {stable_mosaic.version = 11 : i64} {
  func.func @_cmha_kernel(%arg0: i32, %arg1: memref<32x32xbf16, #tpu.memory_space<vmem>>, %arg2: memref<8x128xbf16, #tpu.memory_space<vmem>>, %arg3: memref<32x32xbf16, #tpu.memory_space<vmem>>, %arg4: memref<1x32xf32, #tpu.memory_space<vmem>>, %arg5: memref<128x64xbf16, #tpu.memory_space<vmem>>, %arg6: memref<8x64xf32, #tpu.memory_space<vmem>>, %arg7: memref<32x32xbf16, #tpu.memory_space<vmem>>, %arg8: memref<1x32xf32, #tpu.memory_space<vmem>>, %arg9: memref<1x32x32xf32, #tpu.memory_space<vmem>>, %arg10: memref<1x32x32xbf16, #tpu.memory_space<vmem>>, %arg11: memref<1x8x32xbf16, #tpu.memory_space<vmem>>, %arg12: memref<1x8x32xbf16, #tpu.memory_space<vmem>>) attributes {dimension_semantics = [#tpu.dimension_semantics<parallel>], iteration_bounds = array<i64: 2>, scalar_prefetch = 0 : i64, scratch_operands = 3 : i64, tpu.core_type = #tpu.core_type<tc>, window_params = [{transform_indices = @transform_0, window_bounds = array<i64: 32, 32>}, {transform_indices = @transform_1, window_bounds = array<i64: 8, 128>}, {pipeline_mode = #tpu.pipeline_mode<synchronous>, transform_indices = @transform_2, window_bounds = array<i64: 32, 32>}, {pipeline_mode = #tpu.pipeline_mode<synchronous>, transform_indices = @transform_3, window_bounds = array<i64: 1, 32>}, {pipeline_mode = #tpu.pipeline_mode<synchronous>, transform_indices = @transform_4, window_bounds = array<i64: 128, 64>}, {pipeline_mode = #tpu.pipeline_mode<synchronous>, transform_indices = @transform_5, window_bounds = array<i64: 8, 64>}, {pipeline_mode = #tpu.pipeline_mode<synchronous>, transform_indices = @transform_6, window_bounds = array<i64: 32, 32>}, {pipeline_mode = #tpu.pipeline_mode<synchronous>, transform_indices = @transform_7, window_bounds = array<i64: 1, 32>}, {transform_indices = @transform_8, window_bounds = array<i64: 1, 32, 32>}]} {
    %c0 = arith.constant 0 : index
    %c0_0 = arith.constant 0 : index
    %0 = vector.load %arg1[%c0, %c0_0] : memref<32x32xbf16, #tpu.memory_space<vmem>>, vector<32x32xbf16>
    %c0_1 = arith.constant 0 : index
    %c0_2 = arith.constant 0 : index
    %1 = vector.load %arg3[%c0_1, %c0_2] : memref<32x32xbf16, #tpu.memory_space<vmem>>, vector<32x32xbf16>
    %cst = arith.constant dense<0.000000e+00> : vector<32x32xf32>
    %2 = tpu.matmul %0, %1, %cst {dimension_numbers = #tpu.dot_dimension_numbers<[1], [0], [0], [1], [0, 0, 1, 1], [], []>} : vector<32x32xbf16>, vector<32x32xbf16>, vector<32x32xf32> -> vector<32x32xf32>
    %c0_3 = arith.constant 0 : index
    %c0_4 = arith.constant 0 : index
    %3 = vector.load %arg4[%c0_3, %c0_4] : memref<1x32xf32, #tpu.memory_space<vmem>>, vector<1x32xf32>
    %4 = vector.broadcast %3 : vector<1x32xf32> to vector<32x32xf32>
    %5 = arith.addf %2, %4 : vector<32x32xf32>
    %6 = vector.shape_cast %5 : vector<32x32xf32> to vector<1x32x32xf32>
    %7 = arith.truncf %6 : vector<1x32x32xf32> to vector<1x32x32xbf16>
    %c0_5 = arith.constant 0 : index
    %c0_6 = arith.constant 0 : index
    %c0_7 = arith.constant 0 : index
    %8 = vector.load %arg10[%c0_5, %c0_6, %c0_7] : memref<1x32x32xbf16, #tpu.memory_space<vmem>>, vector<1x32x32xbf16>
    tpu.vector_store %arg10[%c0_5, %c0_6, %c0_7], %7 {strides = array<i32>} : memref<1x32x32xbf16, #tpu.memory_space<vmem>>, vector<1x32x32xbf16>,
    %c0_8 = arith.constant 0 : index
    %c0_9 = arith.constant 0 : index
    %9 = vector.load %arg2[%c0_8, %c0_9] : memref<8x128xbf16, #tpu.memory_space<vmem>>, vector<8x128xbf16>
    %c0_10 = arith.constant 0 : index
    %c0_11 = arith.constant 0 : index
    %10 = vector.load %arg5[%c0_10, %c0_11] : memref<128x64xbf16, #tpu.memory_space<vmem>>, vector<128x64xbf16>
    %cst_12 = arith.constant dense<0.000000e+00> : vector<8x64xf32>
    %11 = tpu.matmul %9, %10, %cst_12 {dimension_numbers = #tpu.dot_dimension_numbers<[1], [0], [0], [1], [0, 0, 1, 1], [], []>} : vector<8x128xbf16>, vector<128x64xbf16>, vector<8x64xf32> -> vector<8x64xf32>
    %12 = vector.shape_cast %11 : vector<8x64xf32> to vector<1x8x64xf32>
    %c0_13 = arith.constant 0 : index
    %c0_14 = arith.constant 0 : index
    %13 = vector.load %arg6[%c0_13, %c0_14] : memref<8x64xf32, #tpu.memory_space<vmem>>, vector<8x64xf32>
    %14 = vector.shape_cast %13 : vector<8x64xf32> to vector<1x8x64xf32>
    %15 = arith.addf %12, %14 : vector<1x8x64xf32>
    %16 = arith.truncf %15 : vector<1x8x64xf32> to vector<1x8x64xbf16>
    %17 = vector.extract_strided_slice %16 {offsets = [0, 0, 0], sizes = [1, 8, 32], strides = [1, 1, 1]} : vector<1x8x64xbf16> to vector<1x8x32xbf16>
    %c0_15 = arith.constant 0 : index
    %c0_16 = arith.constant 0 : index
    %c0_17 = arith.constant 0 : index
    %18 = vector.load %arg11[%c0_15, %c0_16, %c0_17] : memref<1x8x32xbf16, #tpu.memory_space<vmem>>, vector<1x8x32xbf16>
    tpu.vector_store %arg11[%c0_15, %c0_16, %c0_17], %17 {strides = array<i32>} : memref<1x8x32xbf16, #tpu.memory_space<vmem>>, vector<1x8x32xbf16>,
    %19 = vector.extract_strided_slice %16 {offsets = [0, 0, 32], sizes = [1, 8, 32], strides = [1, 1, 1]} : vector<1x8x64xbf16> to vector<1x8x32xbf16>
    %c0_18 = arith.constant 0 : index
    %c0_19 = arith.constant 0 : index
    %c0_20 = arith.constant 0 : index
    %20 = vector.load %arg12[%c0_18, %c0_19, %c0_20] : memref<1x8x32xbf16, #tpu.memory_space<vmem>>, vector<1x8x32xbf16>
    tpu.vector_store %arg12[%c0_18, %c0_19, %c0_20], %19 {strides = array<i32>} : memref<1x8x32xbf16, #tpu.memory_space<vmem>>, vector<1x8x32xbf16>,
    %c0_21 = arith.constant 0 : index
    %c0_22 = arith.constant 0 : index
    %c0_23 = arith.constant 0 : index
    %21 = vector.load %arg10[%c0_21, %c0_22, %c0_23] : memref<1x32x32xbf16, #tpu.memory_space<vmem>>, vector<1x32x32xbf16>
    %c0_24 = arith.constant 0 : index
    %c0_25 = arith.constant 0 : index
    %c0_26 = arith.constant 0 : index
    %22 = vector.load %arg11[%c0_24, %c0_25, %c0_26] : memref<1x8x32xbf16, #tpu.memory_space<vmem>>, vector<1x8x32xbf16>
    "tpu.trace_start"() <{level = 10 : i32, message = "bqd,bkd->bqk"}> : () -> ()
    %cst_27 = arith.constant dense<0.000000e+00> : vector<1x32x8xf32>
    %23 = tpu.matmul %21, %22, %cst_27 {dimension_numbers = #tpu.dot_dimension_numbers<[2], [2], [1], [1], [0, 0, 0, 1, 1, 1], [0], [0]>} : vector<1x32x32xbf16>, vector<1x8x32xbf16>, vector<1x32x8xf32> -> vector<1x32x8xf32>
    "tpu.trace_stop"() : () -> ()
    %24 = tpu.iota {dimensions = array<i32: 0>} : vector<32x8xi32>
    %c0_i32 = arith.constant 0 : i32
    %25 = vector.broadcast %c0_i32 : i32 to vector<32x8xi32>
    %26 = arith.addi %25, %24 : vector<32x8xi32>
    %27 = tpu.iota {dimensions = array<i32: 1>} : vector<32x8xi32>
    %c4_i32 = arith.constant 4 : i32
    %28 = vector.broadcast %c4_i32 : i32 to vector<32x8xi32>
    %29 = arith.cmpi slt, %27, %28 : vector<32x8xi32>
    %30 = arith.cmpi sle, %27, %26 : vector<32x8xi32>
    %31 = arith.andi %29, %30 : vector<32x8xi1>
    %32 = vector.shape_cast %31 : vector<32x8xi1> to vector<1x32x8xi1>
    %cst_28 = arith.constant -1.000000e+30 : f32
    %33 = vector.broadcast %cst_28 : f32 to vector<1x32x8xf32>
    %34 = arith.select %32, %23, %33 : vector<1x32x8xi1>, vector<1x32x8xf32>
    %cst_29 = arith.constant dense<0xFF800000> : vector<1x32xf32>
    %35 = vector.multi_reduction <maximumf>, %34, %cst_29 [2] : vector<1x32x8xf32> to vector<1x32xf32>
    %36 = vector.shape_cast %35 : vector<1x32xf32> to vector<1x32x1xf32>
    %37 = vector.broadcast %36 : vector<1x32x1xf32> to vector<1x32x8xf32>
    %38 = arith.subf %34, %37 : vector<1x32x8xf32>
    %39 = math.exp %38 : vector<1x32x8xf32>
    %cst_30 = arith.constant dense<0.000000e+00> : vector<1x32xf32>
    %40 = vector.multi_reduction <add>, %39, %cst_30 [2] : vector<1x32x8xf32> to vector<1x32xf32>
    %41 = vector.shape_cast %40 : vector<1x32xf32> to vector<1x32x1xf32>
    %42 = tpu.reciprocal %41 {approx = true} : vector<1x32x1xf32> -> vector<1x32x1xf32>
    %43 = vector.broadcast %42 : vector<1x32x1xf32> to vector<1x32x8xf32>
    %44 = arith.mulf %39, %43 : vector<1x32x8xf32>
    %45 = arith.truncf %44 : vector<1x32x8xf32> to vector<1x32x8xbf16>
    %c0_31 = arith.constant 0 : index
    %c0_32 = arith.constant 0 : index
    %c0_33 = arith.constant 0 : index
    %46 = vector.load %arg12[%c0_31, %c0_32, %c0_33] : memref<1x8x32xbf16, #tpu.memory_space<vmem>>, vector<1x8x32xbf16>
    "tpu.trace_start"() <{level = 10 : i32, message = "bqk,bkd->bqd"}> : () -> ()
    %cst_34 = arith.constant dense<0.000000e+00> : vector<1x32x32xf32>
    %47 = tpu.matmul %45, %46, %cst_34 {dimension_numbers = #tpu.dot_dimension_numbers<[2], [1], [1], [2], [0, 0, 0, 1, 1, 2], [0], [0]>} : vector<1x32x8xbf16>, vector<1x8x32xbf16>, vector<1x32x32xf32> -> vector<1x32x32xf32>
    "tpu.trace_stop"() : () -> ()
    %48 = vector.shape_cast %47 : vector<1x32x32xf32> to vector<32x32xf32>
    %49 = arith.truncf %48 : vector<32x32xf32> to vector<32x32xbf16>
    %c0_35 = arith.constant 0 : index
    %c0_36 = arith.constant 0 : index
    %50 = vector.load %arg7[%c0_35, %c0_36] : memref<32x32xbf16, #tpu.memory_space<vmem>>, vector<32x32xbf16>
    %cst_37 = arith.constant dense<0.000000e+00> : vector<32x32xf32>
    %51 = tpu.matmul %49, %50, %cst_37 {dimension_numbers = #tpu.dot_dimension_numbers<[1], [0], [0], [1], [0, 0, 1, 1], [], []>} : vector<32x32xbf16>, vector<32x32xbf16>, vector<32x32xf32> -> vector<32x32xf32>
    %c0_38 = arith.constant 0 : index
    %c0_39 = arith.constant 0 : index
    %52 = vector.load %arg8[%c0_38, %c0_39] : memref<1x32xf32, #tpu.memory_space<vmem>>, vector<1x32xf32>
    %53 = vector.broadcast %52 : vector<1x32xf32> to vector<32x32xf32>
    %54 = arith.addf %51, %53 : vector<32x32xf32>
    %55 = vector.shape_cast %54 : vector<32x32xf32> to vector<1x32x32xf32>
    %c0_40 = arith.constant 0 : index
    %c0_41 = arith.constant 0 : index
    %c0_42 = arith.constant 0 : index
    %56 = vector.load %arg9[%c0_40, %c0_41, %c0_42] : memref<1x32x32xf32, #tpu.memory_space<vmem>>, vector<1x32x32xf32>
    tpu.vector_store %arg9[%c0_40, %c0_41, %c0_42], %55 {strides = array<i32>} : memref<1x32x32xf32, #tpu.memory_space<vmem>>, vector<1x32x32xf32>,
    return
  }
  func.func @transform_0(%arg0: i32) -> (i32, i32) {
    %c0_i32 = arith.constant 0 : i32
    %c0_i32_0 = arith.constant 0 : i32
    return %arg0, %c0_i32 : i32, i32
  }
  func.func @transform_1(%arg0: i32) -> (i32, i32) {
    %c0_i32 = arith.constant 0 : i32
    %c0_i32_0 = arith.constant 0 : i32
    return %arg0, %c0_i32 : i32, i32
  }
  func.func @transform_2(%arg0: i32) -> (i32, i32) {
    %c0_i32 = arith.constant 0 : i32
    %c0_i32_0 = arith.constant 0 : i32
    %c0_i32_1 = arith.constant 0 : i32
    return %c0_i32, %c0_i32_0 : i32, i32
  }
  func.func @transform_3(%arg0: i32) -> (i32, i32) {
    %c0_i32 = arith.constant 0 : i32
    %c0_i32_0 = arith.constant 0 : i32
    %c0_i32_1 = arith.constant 0 : i32
    return %c0_i32, %c0_i32_0 : i32, i32
  }
  func.func @transform_4(%arg0: i32) -> (i32, i32) {
    %c0_i32 = arith.constant 0 : i32
    %c0_i32_0 = arith.constant 0 : i32
    %c0_i32_1 = arith.constant 0 : i32
    return %c0_i32, %c0_i32_0 : i32, i32
  }
  func.func @transform_5(%arg0: i32) -> (i32, i32) {
    %c0_i32 = arith.constant 0 : i32
    %c0_i32_0 = arith.constant 0 : i32
    %c0_i32_1 = arith.constant 0 : i32
    return %c0_i32, %c0_i32_0 : i32, i32
  }
  func.func @transform_6(%arg0: i32) -> (i32, i32) {
    %c0_i32 = arith.constant 0 : i32
    %c0_i32_0 = arith.constant 0 : i32
    %c0_i32_1 = arith.constant 0 : i32
    return %c0_i32, %c0_i32_0 : i32, i32
  }
  func.func @transform_7(%arg0: i32) -> (i32, i32) {
    %c0_i32 = arith.constant 0 : i32
    %c0_i32_0 = arith.constant 0 : i32
    %c0_i32_1 = arith.constant 0 : i32
    return %c0_i32, %c0_i32_0 : i32, i32
  }
  func.func @transform_8(%arg0: i32) -> (i32, i32, i32) {
    %c0_i32 = arith.constant 0 : i32
    %c0_i32_0 = arith.constant 0 : i32
    %c0_i32_1 = arith.constant 0 : i32
    return %arg0, %c0_i32, %c0_i32_0 : i32, i32, i32
  }
}

module attributes {stable_mosaic.version = 11 : i64} {
  func.func @_cmha_kernel(%arg0: i32, %arg1: memref<32x32xbf16, #tpu.memory_space<vmem>>, %arg2: memref<8x128xbf16, #tpu.memory_space<vmem>>, %arg3: memref<32x32xbf16, #tpu.memory_space<vmem>>, %arg4: memref<1x32xf32, #tpu.memory_space<vmem>>, %arg5: memref<128x64xbf16, #tpu.memory_space<vmem>>, %arg6: memref<8x64xf32, #tpu.memory_space<vmem>>, %arg7: memref<32x32xbf16, #tpu.memory_space<vmem>>, %arg8: memref<1x32xf32, #tpu.memory_space<vmem>>, %arg9: memref<1x32x32xf32, #tpu.memory_space<vmem>>, %arg10: memref<1x32x32xbf16, #tpu.memory_space<vmem>>, %arg11: memref<1x8x32xbf16, #tpu.memory_space<vmem>>, %arg12: memref<1x8x32xbf16, #tpu.memory_space<vmem>>) attributes {dimension_semantics = [#tpu.dimension_semantics<parallel>], iteration_bounds = array<i64: 2>, scalar_prefetch = 0 : i64, scratch_operands = 3 : i64, tpu.core_type = #tpu.core_type<tc>, window_params = [{transform_indices = @transform_0, window_bounds = array<i64: 32, 32>}, {transform_indices = @transform_1, window_bounds = array<i64: 8, 128>}, {pipeline_mode = #tpu.pipeline_mode<synchronous>, transform_indices = @transform_2, window_bounds = array<i64: 32, 32>}, {pipeline_mode = #tpu.pipeline_mode<synchronous>, transform_indices = @transform_3, window_bounds = array<i64: 1, 32>}, {pipeline_mode = #tpu.pipeline_mode<synchronous>, transform_indices = @transform_4, window_bounds = array<i64: 128, 64>}, {pipeline_mode = #tpu.pipeline_mode<synchronous>, transform_indices = @transform_5, window_bounds = array<i64: 8, 64>}, {pipeline_mode = #tpu.pipeline_mode<synchronous>, transform_indices = @transform_6, window_bounds = array<i64: 32, 32>}, {pipeline_mode = #tpu.pipeline_mode<synchronous>, transform_indices = @transform_7, window_bounds = array<i64: 1, 32>}, {transform_indices = @transform_8, window_bounds = array<i64: 1, 32, 32>}]} {
    %c0 = arith.constant 0 : index
    %c0_0 = arith.constant 0 : index
    %0 = vector.load %arg1[%c0, %c0_0] : memref<32x32xbf16, #tpu.memory_space<vmem>>, vector<32x32xbf16>
    %c0_1 = arith.constant 0 : index
    %c0_2 = arith.constant 0 : index
    %1 = vector.load %arg3[%c0_1, %c0_2] : memref<32x32xbf16, #tpu.memory_space<vmem>>, vector<32x32xbf16>
    %cst = arith.constant dense<0.000000e+00> : vector<32x32xf32>
    %2 = tpu.matmul %0, %1, %cst {dimension_numbers = #tpu.dot_dimension_numbers<[1], [0], [0], [1], [0, 0, 1, 1], [], []>} : vector<32x32xbf16>, vector<32x32xbf16>, vector<32x32xf32> -> vector<32x32xf32>
    %c0_3 = arith.constant 0 : index
    %c0_4 = arith.constant 0 : index
    %3 = vector.load %arg4[%c0_3, %c0_4] : memref<1x32xf32, #tpu.memory_space<vmem>>, vector<1x32xf32>
    %4 = vector.broadcast %3 : vector<1x32xf32> to vector<32x32xf32>
    %5 = arith.addf %2, %4 : vector<32x32xf32>
    %6 = vector.shape_cast %5 : vector<32x32xf32> to vector<1x32x32xf32>
    %7 = arith.truncf %6 : vector<1x32x32xf32> to vector<1x32x32xbf16>
    %c0_5 = arith.constant 0 : index
    %c0_6 = arith.constant 0 : index
    %c0_7 = arith.constant 0 : index
    %8 = vector.load %arg10[%c0_5, %c0_6, %c0_7] : memref<1x32x32xbf16, #tpu.memory_space<vmem>>, vector<1x32x32xbf16>
    tpu.vector_store %arg10[%c0_5, %c0_6, %c0_7], %7 {strides = array<i32>} : memref<1x32x32xbf16, #tpu.memory_space<vmem>>, vector<1x32x32xbf16>,
    %c0_8 = arith.constant 0 : index
    %c0_9 = arith.constant 0 : index
    %9 = vector.load %arg2[%c0_8, %c0_9] : memref<8x128xbf16, #tpu.memory_space<vmem>>, vector<8x128xbf16>
    %c0_10 = arith.constant 0 : index
    %c0_11 = arith.constant 0 : index
    %10 = vector.load %arg5[%c0_10, %c0_11] : memref<128x64xbf16, #tpu.memory_space<vmem>>, vector<128x64xbf16>
    %cst_12 = arith.constant dense<0.000000e+00> : vector<8x64xf32>
    %11 = tpu.matmul %9, %10, %cst_12 {dimension_numbers = #tpu.dot_dimension_numbers<[1], [0], [0], [1], [0, 0, 1, 1], [], []>} : vector<8x128xbf16>, vector<128x64xbf16>, vector<8x64xf32> -> vector<8x64xf32>
    %12 = vector.shape_cast %11 : vector<8x64xf32> to vector<1x8x64xf32>
    %c0_13 = arith.constant 0 : index
    %c0_14 = arith.constant 0 : index
    %13 = vector.load %arg6[%c0_13, %c0_14] : memref<8x64xf32, #tpu.memory_space<vmem>>, vector<8x64xf32>
    %14 = vector.shape_cast %13 : vector<8x64xf32> to vector<1x8x64xf32>
    %15 = arith.addf %12, %14 : vector<1x8x64xf32>
    %16 = arith.truncf %15 : vector<1x8x64xf32> to vector<1x8x64xbf16>
    %17 = vector.extract_strided_slice %16 {offsets = [0, 0, 0], sizes = [1, 8, 32], strides = [1, 1, 1]} : vector<1x8x64xbf16> to vector<1x8x32xbf16>
    %c0_15 = arith.constant 0 : index
    %c0_16 = arith.constant 0 : index
    %c0_17 = arith.constant 0 : index
    %18 = vector.load %arg11[%c0_15, %c0_16, %c0_17] : memref<1x8x32xbf16, #tpu.memory_space<vmem>>, vector<1x8x32xbf16>
    tpu.vector_store %arg11[%c0_15, %c0_16, %c0_17], %17 {strides = array<i32>} : memref<1x8x32xbf16, #tpu.memory_space<vmem>>, vector<1x8x32xbf16>,
    %19 = vector.extract_strided_slice %16 {offsets = [0, 0, 32], sizes = [1, 8, 32], strides = [1, 1, 1]} : vector<1x8x64xbf16> to vector<1x8x32xbf16>
    %c0_18 = arith.constant 0 : index
    %c0_19 = arith.constant 0 : index
    %c0_20 = arith.constant 0 : index
    %20 = vector.load %arg12[%c0_18, %c0_19, %c0_20] : memref<1x8x32xbf16, #tpu.memory_space<vmem>>, vector<1x8x32xbf16>
    tpu.vector_store %arg12[%c0_18, %c0_19, %c0_20], %19 {strides = array<i32>} : memref<1x8x32xbf16, #tpu.memory_space<vmem>>, vector<1x8x32xbf16>,
    %c0_21 = arith.constant 0 : index
    %c0_22 = arith.constant 0 : index
    %c0_23 = arith.constant 0 : index
    %21 = vector.load %arg10[%c0_21, %c0_22, %c0_23] : memref<1x32x32xbf16, #tpu.memory_space<vmem>>, vector<1x32x32xbf16>
    %c0_24 = arith.constant 0 : index
    %c0_25 = arith.constant 0 : index
    %c0_26 = arith.constant 0 : index
    %22 = vector.load %arg11[%c0_24, %c0_25, %c0_26] : memref<1x8x32xbf16, #tpu.memory_space<vmem>>, vector<1x8x32xbf16>
    "tpu.trace_start"() <{level = 10 : i32, message = "bqd,bkd->bqk"}> : () -> ()
    %cst_27 = arith.constant dense<0.000000e+00> : vector<1x32x8xf32>
    %23 = tpu.matmul %21, %22, %cst_27 {dimension_numbers = #tpu.dot_dimension_numbers<[2], [2], [1], [1], [0, 0, 0, 1, 1, 1], [0], [0]>} : vector<1x32x32xbf16>, vector<1x8x32xbf16>, vector<1x32x8xf32> -> vector<1x32x8xf32>
    "tpu.trace_stop"() : () -> ()
    %24 = tpu.iota {dimensions = array<i32: 0>} : vector<32x8xi32>
    %c0_i32 = arith.constant 0 : i32
    %25 = vector.broadcast %c0_i32 : i32 to vector<32x8xi32>
    %26 = arith.addi %25, %24 : vector<32x8xi32>
    %27 = tpu.iota {dimensions = array<i32: 1>} : vector<32x8xi32>
    %c4_i32 = arith.constant 4 : i32
    %28 = vector.broadcast %c4_i32 : i32 to vector<32x8xi32>
    %29 = arith.cmpi slt, %27, %28 : vector<32x8xi32>
    %30 = arith.cmpi sle, %27, %26 : vector<32x8xi32>
    %31 = arith.andi %29, %30 : vector<32x8xi1>
    %32 = vector.shape_cast %31 : vector<32x8xi1> to vector<1x32x8xi1>
    %cst_28 = arith.constant -1.000000e+30 : f32
    %33 = vector.broadcast %cst_28 : f32 to vector<1x32x8xf32>
    %34 = arith.select %32, %23, %33 : vector<1x32x8xi1>, vector<1x32x8xf32>
    %cst_29 = arith.constant dense<0xFF800000> : vector<1x32xf32>
    %35 = vector.multi_reduction <maximumf>, %34, %cst_29 [2] : vector<1x32x8xf32> to vector<1x32xf32>
    %36 = vector.shape_cast %35 : vector<1x32xf32> to vector<1x32x1xf32>
    %37 = vector.broadcast %36 : vector<1x32x1xf32> to vector<1x32x8xf32>
    %38 = arith.subf %34, %37 : vector<1x32x8xf32>
    %39 = math.exp %38 : vector<1x32x8xf32>
    %cst_30 = arith.constant dense<0.000000e+00> : vector<1x32xf32>
    %40 = vector.multi_reduction <add>, %39, %cst_30 [2] : vector<1x32x8xf32> to vector<1x32xf32>
    %41 = vector.shape_cast %40 : vector<1x32xf32> to vector<1x32x1xf32>
    %42 = tpu.reciprocal %41 {approx = true} : vector<1x32x1xf32> -> vector<1x32x1xf32>
    %43 = vector.broadcast %42 : vector<1x32x1xf32> to vector<1x32x8xf32>
    %44 = arith.mulf %39, %43 : vector<1x32x8xf32>
    %45 = arith.truncf %44 : vector<1x32x8xf32> to vector<1x32x8xbf16>
    %c0_31 = arith.constant 0 : index
    %c0_32 = arith.constant 0 : index
    %c0_33 = arith.constant 0 : index
    %46 = vector.load %arg12[%c0_31, %c0_32, %c0_33] : memref<1x8x32xbf16, #tpu.memory_space<vmem>>, vector<1x8x32xbf16>
    "tpu.trace_start"() <{level = 10 : i32, message = "bqk,bkd->bqd"}> : () -> ()
    %cst_34 = arith.constant dense<0.000000e+00> : vector<1x32x32xf32>
    %47 = tpu.matmul %45, %46, %cst_34 {dimension_numbers = #tpu.dot_dimension_numbers<[2], [1], [1], [2], [0, 0, 0, 1, 1, 2], [0], [0]>} : vector<1x32x8xbf16>, vector<1x8x32xbf16>, vector<1x32x32xf32> -> vector<1x32x32xf32>
    "tpu.trace_stop"() : () -> ()
    %48 = vector.shape_cast %47 : vector<1x32x32xf32> to vector<32x32xf32>
    %49 = arith.truncf %48 : vector<32x32xf32> to vector<32x32xbf16>
    %c0_35 = arith.constant 0 : index
    %c0_36 = arith.constant 0 : index
    %50 = vector.load %arg7[%c0_35, %c0_36] : memref<32x32xbf16, #tpu.memory_space<vmem>>, vector<32x32xbf16>
    %cst_37 = arith.constant dense<0.000000e+00> : vector<32x32xf32>
    %51 = tpu.matmul %49, %50, %cst_37 {dimension_numbers = #tpu.dot_dimension_numbers<[1], [0], [0], [1], [0, 0, 1, 1], [], []>} : vector<32x32xbf16>, vector<32x32xbf16>, vector<32x32xf32> -> vector<32x32xf32>
    %c0_38 = arith.constant 0 : index
    %c0_39 = arith.constant 0 : index
    %52 = vector.load %arg8[%c0_38, %c0_39] : memref<1x32xf32, #tpu.memory_space<vmem>>, vector<1x32xf32>
    %53 = vector.broadcast %52 : vector<1x32xf32> to vector<32x32xf32>
    %54 = arith.addf %51, %53 : vector<32x32xf32>
    %55 = vector.shape_cast %54 : vector<32x32xf32> to vector<1x32x32xf32>
    %c0_40 = arith.constant 0 : index
    %c0_41 = arith.constant 0 : index
    %c0_42 = arith.constant 0 : index
    %56 = vector.load %arg9[%c0_40, %c0_41, %c0_42] : memref<1x32x32xf32, #tpu.memory_space<vmem>>, vector<1x32x32xf32>
    tpu.vector_store %arg9[%c0_40, %c0_41, %c0_42], %55 {strides = array<i32>} : memref<1x32x32xf32, #tpu.memory_space<vmem>>, vector<1x32x32xf32>,
    return
  }
  func.func @transform_0(%arg0: i32) -> (i32, i32) {
    %c0_i32 = arith.constant 0 : i32
    %c0_i32_0 = arith.constant 0 : i32
    return %arg0, %c0_i32 : i32, i32
  }
  func.func @transform_1(%arg0: i32) -> (i32, i32) {
    %c0_i32 = arith.constant 0 : i32
    %c0_i32_0 = arith.constant 0 : i32
    return %arg0, %c0_i32 : i32, i32
  }
  func.func @transform_2(%arg0: i32) -> (i32, i32) {
    %c0_i32 = arith.constant 0 : i32
    %c0_i32_0 = arith.constant 0 : i32
    %c0_i32_1 = arith.constant 0 : i32
    return %c0_i32, %c0_i32_0 : i32, i32
  }
  func.func @transform_3(%arg0: i32) -> (i32, i32) {
    %c0_i32 = arith.constant 0 : i32
    %c0_i32_0 = arith.constant 0 : i32
    %c0_i32_1 = arith.constant 0 : i32
    return %c0_i32, %c0_i32_0 : i32, i32
  }
  func.func @transform_4(%arg0: i32) -> (i32, i32) {
    %c0_i32 = arith.constant 0 : i32
    %c0_i32_0 = arith.constant 0 : i32
    %c0_i32_1 = arith.constant 0 : i32
    return %c0_i32, %c0_i32_0 : i32, i32
  }
  func.func @transform_5(%arg0: i32) -> (i32, i32) {
    %c0_i32 = arith.constant 0 : i32
    %c0_i32_0 = arith.constant 0 : i32
    %c0_i32_1 = arith.constant 0 : i32
    return %c0_i32, %c0_i32_0 : i32, i32
  }
  func.func @transform_6(%arg0: i32) -> (i32, i32) {
    %c0_i32 = arith.constant 0 : i32
    %c0_i32_0 = arith.constant 0 : i32
    %c0_i32_1 = arith.constant 0 : i32
    return %c0_i32, %c0_i32_0 : i32, i32
  }
  func.func @transform_7(%arg0: i32) -> (i32, i32) {
    %c0_i32 = arith.constant 0 : i32
    %c0_i32_0 = arith.constant 0 : i32
    %c0_i32_1 = arith.constant 0 : i32
    return %c0_i32, %c0_i32_0 : i32, i32
  }
  func.func @transform_8(%arg0: i32) -> (i32, i32, i32) {
    %c0_i32 = arith.constant 0 : i32
    %c0_i32_0 = arith.constant 0 : i32
    %c0_i32_1 = arith.constant 0 : i32
    return %arg0, %c0_i32, %c0_i32_0 : i32, i32, i32
  }
}

</mosaic_0001>

<llo_original>
// kernel: tpu_custom_call.1
$region0: #{tpu_custom_call.1}
  #allocation0 [shape = 'u32[]', space=smem, size = 0x4, offset = 0x4, fixed_abs, tag = 'smem constant byte address 0x4 - core index']
  #allocation1 [shape = 'u32[144,128]{1,0:T(1,128)}', space=vmem, size = 0x12000, scoped, tag = 'internal scratch']
  #allocation2 [shape = 'bf16[1,32,32]{2,1,0:T(8,128)(2,1)}', space=vmem, size = 0x2000, scoped, tag = 'scratch operand']
  #allocation3 [shape = 'bf16[1,8,32]{2,1,0:T(8,128)(2,1)}', space=vmem, size = 0x800, scoped, tag = 'scratch operand']
  #allocation4 [shape = 'bf16[1,8,32]{2,1,0:T(8,128)(2,1)}', space=vmem, size = 0x800, scoped, tag = 'scratch operand']
  %s0 = inlined_call_operand.vmem [shape: bf16[64,32], index: 0, kind: input, shape index: {}]
  %s1 = inlined_call_operand.vmem [shape: bf16[16,128], index: 1, kind: input, shape index: {}]
  %s2 = inlined_call_operand.vmem [shape: bf16[32,32], index: 2, kind: input, shape index: {}]
  %s3 = inlined_call_operand.vmem [shape: f32[1,32], index: 3, kind: input, shape index: {}]
  %s4 = inlined_call_operand.vmem [shape: bf16[128,64], index: 4, kind: input, shape index: {}]
  %s5 = inlined_call_operand.vmem [shape: f32[8,64], index: 5, kind: input, shape index: {}]
  %s6 = inlined_call_operand.vmem [shape: bf16[32,32], index: 6, kind: input, shape index: {}]
  %s7 = inlined_call_operand.vmem [shape: f32[1,32], index: 7, kind: input, shape index: {}]
  %s8 = inlined_call_operand.hbm [shape: f32[2,32,32], index: 8, kind: output, shape index: {}]
  %s9 = sld [smem:[#allocation0]]
  $region65: #{tpu_custom_call.1} parent=0
    _
  %s11 = ssub.s32 1, %s9
  %s12 = scalar_select 0, %s11, %s9
  $region1: #{tpu_custom_call.1} parent=0
    #allocation5 [shape = 'u8[32768]{0}', space=vmem, size = 0x8000, scoped, tag = 'output window, operand 0']
    #allocation6 [shape = 's32[2]{0}', space=sflag, size = 0x8, scoped, tag = 'scoped memory for tpu_custom_call.1']
    %13 = vsyncpa [#allocation6], 0
    %s14 = scalar_lea.sflag [#allocation6], 1
    %15 = vsyncpa %s14, 0
    loop: start=0, step=1, limit=4
    $region2: #{tpu_custom_call.1} parent=1 // loop_pre_header
      _
    $region3: #{tpu_custom_call.1} parent=1 // loop_header
      %s17 = sphi 0, %s21
      %p18 = scmp.ge.s32.totalorder %s17, 4
      %s27 = sphi 0, %s29
      %s30 = sphi 0, %s27
      %s31 = sphi 0, %s30
      %s47 = sphi 0, %s31
      %s53 = sphi 0, %s55
      %s56 = sphi 0, %s53
      %s57 = sphi 0, %s56
      %s73 = sphi 0, %s57
      %s77 = sphi 0, %s77
      %s79 = sphi 0, %s77
      %s80 = sphi 0, %s79
      %s94 = sphi 0, %s80
      %s98 = sphi 0, %s98
      %s100 = sphi 0, %s98
      %s101 = sphi 0, %s100
      %s115 = sphi 0, %s101
      %s119 = sphi 0, %s119
      %s121 = sphi 0, %s119
      %s122 = sphi 0, %s121
      %s136 = sphi 0, %s122
      %s140 = sphi 0, %s140
      %s142 = sphi 0, %s140
      %s143 = sphi 0, %s142
      %s157 = sphi 0, %s143
      %s161 = sphi 0, %s161
      %s163 = sphi 0, %s161
      %s164 = sphi 0, %s163
      %s178 = sphi 0, %s164
      %s182 = sphi 0, %s182
      %s184 = sphi 0, %s182
      %s185 = sphi 0, %s184
      %s199 = sphi 0, %s185
      %s205 = sphi 0, %s207
      %s208 = sphi 0, %s205
      %s209 = sphi 0, %s208
      %s225 = sphi 0, %s209
    $region4: #{tpu_custom_call.1} parent=1 // loop_header_branch
      %20 = sbr.rel (%p18) target = $region8
    $region5: #{tpu_custom_call.1} parent=1 // loop_body
      %s22 = ssub.s32 %s17, 1
      %s23 = ssub.s32 %s17, 2
      %s24 = sadd.s32 %s17, 1
      %s25 = ssub.s32 %s17, %s24
      %p26 = scmp.eq.s32.totalorder %s25, 0
      %s28 = sadd.s32 %s27, 1
      %s29 = scalar_select %p26, %s27, %s28
      %p32 = pneg %p26
      %p33 = scmp.eq.s32.totalorder %s17, 1
      %p34 = por %p32, %p33
      %p35 = scmp.ne.s32.totalorder %s27, %s30
      %p36 = scmp.eq.s32.totalorder %s17, 0
      %p37 = por %p35, %p36
      %p38 = scmp.ne.s32.totalorder %s27, %s30
      %p39 = scmp.eq.s32.totalorder %s22, 1
      %p40 = por %p38, %p39
      %p41 = scmp.ne.s32.totalorder %s30, %s31
      %p42 = scmp.eq.s32.totalorder %s22, 0
      %p43 = por %p41, %p42
      %p44 = scmp.ne.s32.totalorder %s30, %s31
      %p45 = scmp.eq.s32.totalorder %s23, 1
      %p46 = por %p44, %p45
      %p48 = scmp.ne.s32.totalorder %s31, %s47
      %p49 = scmp.eq.s32.totalorder %s23, 0
      %p50 = por %p48, %p49
      %s51 = ssub.s32 %s17, %s24
      %p52 = scmp.eq.s32.totalorder %s51, 0
      %s54 = sadd.s32 %s53, 1
      %s55 = scalar_select %p52, %s53, %s54
      %p58 = pneg %p52
      %p59 = scmp.eq.s32.totalorder %s17, 1
      %p60 = por %p58, %p59
      %p61 = scmp.ne.s32.totalorder %s53, %s56
      %p62 = scmp.eq.s32.totalorder %s17, 0
      %p63 = por %p61, %p62
      %p64 = scmp.ne.s32.totalorder %s53, %s56
      %p65 = scmp.eq.s32.totalorder %s22, 1
      %p66 = por %p64, %p65
      %p67 = scmp.ne.s32.totalorder %s56, %s57
      %p68 = scmp.eq.s32.totalorder %s22, 0
      %p69 = por %p67, %p68
      %p70 = scmp.ne.s32.totalorder %s56, %s57
      %p71 = scmp.eq.s32.totalorder %s23, 1
      %p72 = por %p70, %p71
      %p74 = scmp.ne.s32.totalorder %s57, %s73
      %p75 = scmp.eq.s32.totalorder %s23, 0
      %p76 = por %p74, %p75
      %s78 = sadd.s32 %s77, 1
      %p81 = scmp.eq.s32.totalorder %s17, 1
      %p82 = scmp.ne.s32.totalorder %s77, %s79
      %p83 = scmp.eq.s32.totalorder %s17, 0
      %p84 = por %p82, %p83
      %p85 = scmp.ne.s32.totalorder %s77, %s79
      %p86 = scmp.eq.s32.totalorder %s22, 1
      %p87 = por %p85, %p86
      %p88 = scmp.ne.s32.totalorder %s79, %s80
      %p89 = scmp.eq.s32.totalorder %s22, 0
      %p90 = por %p88, %p89
      %p91 = scmp.ne.s32.totalorder %s79, %s80
      %p92 = scmp.eq.s32.totalorder %s23, 1
      %p93 = por %p91, %p92
      %p95 = scmp.ne.s32.totalorder %s80, %s94
      %p96 = scmp.eq.s32.totalorder %s23, 0
      %p97 = por %p95, %p96
      %s99 = sadd.s32 %s98, 1
      %p102 = scmp.eq.s32.totalorder %s17, 1
      %p103 = scmp.ne.s32.totalorder %s98, %s100
      %p104 = scmp.eq.s32.totalorder %s17, 0
      %p105 = por %p103, %p104
      %p106 = scmp.ne.s32.totalorder %s98, %s100
      %p107 = scmp.eq.s32.totalorder %s22, 1
      %p108 = por %p106, %p107
      %p109 = scmp.ne.s32.totalorder %s100, %s101
      %p110 = scmp.eq.s32.totalorder %s22, 0
      %p111 = por %p109, %p110
      %p112 = scmp.ne.s32.totalorder %s100, %s101
      %p113 = scmp.eq.s32.totalorder %s23, 1
      %p114 = por %p112, %p113
      %p116 = scmp.ne.s32.totalorder %s101, %s115
      %p117 = scmp.eq.s32.totalorder %s23, 0
      %p118 = por %p116, %p117
      %s120 = sadd.s32 %s119, 1
      %p123 = scmp.eq.s32.totalorder %s17, 1
      %p124 = scmp.ne.s32.totalorder %s119, %s121
      %p125 = scmp.eq.s32.totalorder %s17, 0
      %p126 = por %p124, %p125
      %p127 = scmp.ne.s32.totalorder %s119, %s121
      %p128 = scmp.eq.s32.totalorder %s22, 1
      %p129 = por %p127, %p128
      %p130 = scmp.ne.s32.totalorder %s121, %s122
      %p131 = scmp.eq.s32.totalorder %s22, 0
      %p132 = por %p130, %p131
      %p133 = scmp.ne.s32.totalorder %s121, %s122
      %p134 = scmp.eq.s32.totalorder %s23, 1
      %p135 = por %p133, %p134
      %p137 = scmp.ne.s32.totalorder %s122, %s136
      %p138 = scmp.eq.s32.totalorder %s23, 0
      %p139 = por %p137, %p138
      %s141 = sadd.s32 %s140, 1
      %p144 = scmp.eq.s32.totalorder %s17, 1
      %p145 = scmp.ne.s32.totalorder %s140, %s142
      %p146 = scmp.eq.s32.totalorder %s17, 0
      %p147 = por %p145, %p146
      %p148 = scmp.ne.s32.totalorder %s140, %s142
      %p149 = scmp.eq.s32.totalorder %s22, 1
      %p150 = por %p148, %p149
      %p151 = scmp.ne.s32.totalorder %s142, %s143
      %p152 = scmp.eq.s32.totalorder %s22, 0
      %p153 = por %p151, %p152
      %p154 = scmp.ne.s32.totalorder %s142, %s143
      %p155 = scmp.eq.s32.totalorder %s23, 1
      %p156 = por %p154, %p155
      %p158 = scmp.ne.s32.totalorder %s143, %s157
      %p159 = scmp.eq.s32.totalorder %s23, 0
      %p160 = por %p158, %p159
      %s162 = sadd.s32 %s161, 1
      %p165 = scmp.eq.s32.totalorder %s17, 1
      %p166 = scmp.ne.s32.totalorder %s161, %s163
      %p167 = scmp.eq.s32.totalorder %s17, 0
      %p168 = por %p166, %p167
      %p169 = scmp.ne.s32.totalorder %s161, %s163
      %p170 = scmp.eq.s32.totalorder %s22, 1
      %p171 = por %p169, %p170
      %p172 = scmp.ne.s32.totalorder %s163, %s164
      %p173 = scmp.eq.s32.totalorder %s22, 0
      %p174 = por %p172, %p173
      %p175 = scmp.ne.s32.totalorder %s163, %s164
      %p176 = scmp.eq.s32.totalorder %s23, 1
      %p177 = por %p175, %p176
      %p179 = scmp.ne.s32.totalorder %s164, %s178
      %p180 = scmp.eq.s32.totalorder %s23, 0
      %p181 = por %p179, %p180
      %s183 = sadd.s32 %s182, 1
      %p186 = scmp.eq.s32.totalorder %s17, 1
      %p187 = scmp.ne.s32.totalorder %s182, %s184
      %p188 = scmp.eq.s32.totalorder %s17, 0
      %p189 = por %p187, %p188
      %p190 = scmp.ne.s32.totalorder %s182, %s184
      %p191 = scmp.eq.s32.totalorder %s22, 1
      %p192 = por %p190, %p191
      %p193 = scmp.ne.s32.totalorder %s184, %s185
      %p194 = scmp.eq.s32.totalorder %s22, 0
      %p195 = por %p193, %p194
      %p196 = scmp.ne.s32.totalorder %s184, %s185
      %p197 = scmp.eq.s32.totalorder %s23, 1
      %p198 = por %p196, %p197
      %p200 = scmp.ne.s32.totalorder %s185, %s199
      %p201 = scmp.eq.s32.totalorder %s23, 0
      %p202 = por %p200, %p201
      %s203 = ssub.s32 %s17, %s24
      %p204 = scmp.eq.s32.totalorder %s203, 0
      %s206 = sadd.s32 %s205, 1
      %s207 = scalar_select %p204, %s205, %s206
      %p210 = pneg %p204
      %p211 = scmp.eq.s32.totalorder %s17, 1
      %p212 = por %p210, %p211
      %p213 = scmp.ne.s32.totalorder %s205, %s208
      %p214 = scmp.eq.s32.totalorder %s17, 0
      %p215 = por %p213, %p214
      %p216 = scmp.ne.s32.totalorder %s205, %s208
      %p217 = scmp.eq.s32.totalorder %s22, 1
      %p218 = por %p216, %p217
      %p219 = scmp.ne.s32.totalorder %s208, %s209
      %p220 = scmp.eq.s32.totalorder %s22, 0
      %p221 = por %p219, %p220
      %p222 = scmp.ne.s32.totalorder %s208, %s209
      %p223 = scmp.eq.s32.totalorder %s23, 1
      %p224 = por %p222, %p223
      %p226 = scmp.ne.s32.totalorder %s209, %s225
      %p227 = scmp.eq.s32.totalorder %s23, 0
      %p228 = por %p226, %p227
      %p229 = scmp.le.s32.totalorder 1, %s17
      %p230 = scmp.lt.s32.totalorder %s17, 3
      %p231 = pnand %p229, %p230
      %p232 = pneg %p231
      // Predicated region
      $region9: #{tpu_custom_call.1} parent=5 // pred_check
        _
      $region10: #{tpu_custom_call.1} parent=5 // pred_check_branch
        %234 = sbr.rel (%p231) target = $region12
      $region11: #{tpu_custom_call.1} parent=5 // pred_region
        %s235 = ssub.s32 %s17, 1
        // Predicated region
        $region13: #{tpu_custom_call.1} parent=11 // pred_check
          %p236 = pneg %p90
        $region14: #{tpu_custom_call.1} parent=11 // pred_check_branch
          %238 = sbr.rel (%p236) target = $region16
        $region15: #{tpu_custom_call.1} parent=11 // pred_region
          _
        $region16: #{tpu_custom_call.1} parent=11 // pred_fallthru
          _
        // Predicated region
        $region17: #{tpu_custom_call.1} parent=11 // pred_check
          %p239 = pneg %p111
        $region18: #{tpu_custom_call.1} parent=11 // pred_check_branch
          %241 = sbr.rel (%p239) target = $region20
        $region19: #{tpu_custom_call.1} parent=11 // pred_region
          _
        $region20: #{tpu_custom_call.1} parent=11 // pred_fallthru
          _
        // Predicated region
        $region21: #{tpu_custom_call.1} parent=11 // pred_check
          %p242 = pneg %p132
        $region22: #{tpu_custom_call.1} parent=11 // pred_check_branch
          %244 = sbr.rel (%p242) target = $region24
        $region23: #{tpu_custom_call.1} parent=11 // pred_region
          _
        $region24: #{tpu_custom_call.1} parent=11 // pred_fallthru
          _
        // Predicated region
        $region25: #{tpu_custom_call.1} parent=11 // pred_check
          %p245 = pneg %p153
        $region26: #{tpu_custom_call.1} parent=11 // pred_check_branch
          %247 = sbr.rel (%p245) target = $region28
        $region27: #{tpu_custom_call.1} parent=11 // pred_region
          _
        $region28: #{tpu_custom_call.1} parent=11 // pred_fallthru
          _
        // Predicated region
        $region29: #{tpu_custom_call.1} parent=11 // pred_check
          %p248 = pneg %p174
        $region30: #{tpu_custom_call.1} parent=11 // pred_check_branch
          %250 = sbr.rel (%p248) target = $region32
        $region31: #{tpu_custom_call.1} parent=11 // pred_region
          _
        $region32: #{tpu_custom_call.1} parent=11 // pred_fallthru
          _
        // Predicated region
        $region33: #{tpu_custom_call.1} parent=11 // pred_check
          %p251 = pneg %p195
        $region34: #{tpu_custom_call.1} parent=11 // pred_check_branch
          %253 = sbr.rel (%p251) target = $region36
        $region35: #{tpu_custom_call.1} parent=11 // pred_region
          _
        $region36: #{tpu_custom_call.1} parent=11 // pred_fallthru
          _
      $region12: #{tpu_custom_call.1} parent=5 // pred_fallthru
        _
      %p254 = scmp.lt.s32.totalorder %s17, 2
      // Predicated region
      $region37: #{tpu_custom_call.1} parent=5 // pred_check
        %p255 = pneg %p254
      $region38: #{tpu_custom_call.1} parent=5 // pred_check_branch
        %257 = sbr.rel (%p255) target = $region40
      $region39: #{tpu_custom_call.1} parent=5 // pred_region
        // Predicated region
        $region41: #{tpu_custom_call.1} parent=39 // pred_check
          %p258 = pneg %p37
        $region42: #{tpu_custom_call.1} parent=39 // pred_check_branch
          %260 = sbr.rel (%p258) target = $region44
        $region43: #{tpu_custom_call.1} parent=39 // pred_region
          %s261 = smul.u32 4, %s17
          %p262 = scmp.lt.s32.totalorder %s261, 7
          %s263 = scalar_select %p262, %s261, 7
          %s264 = smul.addr %s263, 4
          %s265 = scalar_lea.vmem %s0, %s264
          %s266 = smul.u32 4, %s17
        $region44: #{tpu_custom_call.1} parent=39 // pred_fallthru
          _
        // Predicated region
        $region45: #{tpu_custom_call.1} parent=39 // pred_check
          %p267 = pneg %p63
        $region46: #{tpu_custom_call.1} parent=39 // pred_check_branch
          %269 = sbr.rel (%p267) target = $region48
        $region47: #{tpu_custom_call.1} parent=39 // pred_region
          %p270 = scmp.lt.s32.totalorder %s17, 1
          %s271 = scalar_select %p270, %s17, 1
          %s272 = smul.addr %s271, 4
          %s273 = scalar_lea.vmem %s1, %s272
        $region48: #{tpu_custom_call.1} parent=39 // pred_fallthru
          _
      $region40: #{tpu_custom_call.1} parent=5 // pred_fallthru
        _
      %p274 = scmp.le.s32.totalorder 1, %s17
      %p275 = scmp.lt.s32.totalorder %s17, 3
      %p276 = pnand %p274, %p275
      %p277 = pneg %p276
      // Predicated region
      $region49: #{tpu_custom_call.1} parent=5 // pred_check
        _
      $region50: #{tpu_custom_call.1} parent=5 // pred_check_branch
        %279 = sbr.rel (%p276) target = $region52
      $region51: #{tpu_custom_call.1} parent=5 // pred_region
        %s280 = ssub.s32 %s17, 1
        %s281 = smul.u32 4, %s22
        %p282 = scmp.lt.s32.totalorder %s281, 7
        %s283 = scalar_select %p282, %s281, 7
        %s284 = smul.addr %s283, 4
        %s285 = scalar_lea.vmem %s0, %s284
        %p286 = pneg %p43
        %p287 = pneg %p40
        %p288 = scmp.lt.s32.totalorder %s22, 1
        %s289 = scalar_select %p288, %s22, 1
        %s290 = smul.addr %s289, 4
        %s291 = scalar_lea.vmem %s1, %s290
        %p292 = pneg %p69
        %p293 = pneg %p66
        %p294 = pneg %p90
        %p295 = pneg %p87
        %p296 = pneg %p111
        %p297 = pneg %p108
        %p298 = pneg %p132
        %p299 = pneg %p129
        %p300 = pneg %p153
        %p301 = pneg %p150
        %p302 = pneg %p174
        %p303 = pneg %p171
        %p304 = pneg %p195
        %p305 = pneg %p192
        %p306 = pneg %p221
        %p307 = pneg %p218
        %s308 = sand.u32 %s208, 1
        %s309 = scalar_lea.sflag [#allocation6], %s308
        %s310 = sand.u32 %s208, 1
        %s311 = smul.addr %s310, 32
        %s312 = scalar_lea.vmem [#allocation5], %s311
        %s313 = smul.u32 4, %s22
        %p314 = scmp.lt.s32.totalorder %s313, 7
        %s315 = scalar_select %p314, %s313, 7
        %s316 = smul.addr %s315, 4
        %s317 = scalar_lea.vmem %s0, %s316
        %s318 = smul.u32 4, %s22
        %p319 = scmp.lt.s32.totalorder %s22, 1
        %s320 = scalar_select %p319, %s22, 1
        %s321 = smul.addr %s320, 4
        %s322 = scalar_lea.vmem %s1, %s321
        %v324 = vld [vmem:[%s317] sm:$0xf]
        %v325 = vld [vmem:[%s317 + $0x4] sm:$0xf]
        %v326 = vld [vmem:[%s317 + $0x8] sm:$0xf]
        %v327 = vld [vmem:[%s317 + $0xc] sm:$0xf]
        %v328 = vld [vmem:[%s2] sm:$0xf]
        %v329 = vld [vmem:[%s2 + $0x4] sm:$0xf]
        %v330 = vld [vmem:[%s2 + $0x8] sm:$0xf]
        %v331 = vld [vmem:[%s2 + $0xc] sm:$0xf]
        %v332 = vld [vmem:[%s3] sm:$0x1]
        %v334 = vlaneseq
        %v335 = vshrl.u32 %v334, 7
        %v336 = vsub.s32 0, %v335
        %v337 = vrot.slane %v332, %v336
        %v343 = vunpack.c.l.b16 %v324
        %v344 = vunpack.c.l.b16 %v325
        %v345 = vunpack.c.l.b16 %v326
        %v346 = vunpack.c.l.b16 %v327
        %v347 = vpack.c.b16 %v344, %v343
        %v348 = vpack.c.b16 %v346, %v345
        %v353 = vunpack.c.l.b16 %v328
        %v354 = vunpack.c.l.b16 %v329
        %v355 = vunpack.c.l.b16 %v330
        %v356 = vunpack.c.l.b16 %v331
        %v357 = vpack.c.b16 %v354, %v353
        %v358 = vpack.c.b16 %v356, %v355
        %vm361 = vcmask 261120
        %v363 = vsel %vm361, %v347, 0
        %v366 = vsel %vm361, %v348, 0
        %368 = vmatprep.subr.bf16.mxu0 0
        %369 = vmatpush1.bf16.msra.mxu0 0
        %370 = vmatprep.subr.bf16.mxu0 0
        %371 = vmatpush1.bf16.msra.mxu0 0
        %372 = vmatprep.subr.bf16.mxu0 0
        %373 = vmatpush1.bf16.msra.mxu0 0
        %374 = vmatprep.subr.bf16.mxu0 0
        %375 = vmatpush1.bf16.msra.mxu0 0
        %376 = vmatprep.subr.bf16.mxu0 0
        %377 = vmatpush1.bf16.msra.mxu0 0
        %378 = vmatprep.subr.bf16.mxu0 0
        %379 = vmatpush1.bf16.msra.mxu0 0
        %380 = vmatprep.subr.bf16.mxu0 0
        %381 = vmatpush1.bf16.msra.mxu0 %v358
        %382 = vmatprep.subr.bf16.mxu0 0
        %383 = vmatpush1.bf16.msra.mxu0 %v357
        %384 = vmatprep.subr.bf16.mxu0 0
        %385 = vmatpush2.bf16.msra.mxu0 0
        %386 = vmatprep.subr.bf16.mxu0 0
        %387 = vmatpush2.bf16.msra.mxu0 0
        %388 = vmatprep.subr.bf16.mxu0 0
        %389 = vmatpush2.bf16.msra.mxu0 0
        %390 = vmatprep.subr.bf16.mxu0 0
        %391 = vmatpush2.bf16.msra.mxu0 0
        %392 = vmatprep.subr.bf16.mxu0 0
        %393 = vmatpush2.bf16.msra.mxu0 0
        %394 = vmatprep.subr.bf16.mxu0 0
        %395 = vmatpush2.bf16.msra.mxu0 0
        %396 = vmatprep.subr.bf16.mxu0 0
        %397 = vmatpush2.bf16.msra.mxu0 0
        %398 = vmatprep.subr.bf16.mxu0 0
        %399 = vmatpush2.bf16.msra.mxu0 0
        %400 = vmatprep.mubr.bf16.mxu0 0
        %401 = vmatmul.mubr.bf16.gmra.mxu0 %v363
        %v402 = vpop.f32.mrf.mxu0
        %v403 = vadd.f32 %v337, %v402
        %v404 = vpop.f32.mrf.mxu0
        %v405 = vpop.f32.mrf.mxu0
        %v406 = vadd.f32 %v337, %v405
        %v407 = vpop.f32.mrf.mxu0
        %408 = vmatprep.mubr.bf16.mxu0 0
        %409 = vmatmul.mubr.bf16.gmra.mxu0 %v366
        %v410 = vpop.f32.mrf.mxu0
        %v411 = vadd.f32 %v337, %v410
        %v412 = vpop.f32.mrf.mxu0
        %v413 = vpop.f32.mrf.mxu0
        %v414 = vadd.f32 %v337, %v413
        %v415 = vpop.f32.mrf.mxu0
        %416 = vdwg.mxu0
        %v417 = vpack.c.bf16 %v406, %v403
        %v418 = vpack.c.bf16 %v414, %v411
        %v421 = vunpack.c.l.b16 %v417
        %v422 = vunpack.c.h.b16 %v417
        %v423 = vunpack.c.l.b16 %v418
        %v424 = vunpack.c.h.b16 %v418
        %v425 = vpack.c.b16 %v421, %v421
        %v426 = vpack.c.b16 %v422, %v422
        %v427 = vpack.c.b16 %v423, %v423
        %v428 = vpack.c.b16 %v424, %v424
        %vm433 = vcmask 257024
        %434 = vst.msk [vmem:[#allocation2] sm:$0xf] %vm433, %v425
        %435 = vst.msk [vmem:[#allocation2 + $0x4] sm:$0xf] %vm433, %v426
        %436 = vst.msk [vmem:[#allocation2 + $0x8] sm:$0xf] %vm433, %v427
        %437 = vst.msk [vmem:[#allocation2 + $0xc] sm:$0xf] %vm433, %v428
        %v438 = vld [vmem:[%s322] sm:$0xf]
        %v439 = vld [vmem:[%s4] sm:$0xf]
        %v440 = vld [vmem:[%s4 + $0x4] sm:$0xf]
        %v441 = vld [vmem:[%s4 + $0x8] sm:$0xf]
        %v442 = vld [vmem:[%s4 + $0xc] sm:$0xf]
        %v443 = vld [vmem:[%s4 + $0x10] sm:$0xf]
        %v444 = vld [vmem:[%s4 + $0x14] sm:$0xf]
        %v445 = vld [vmem:[%s4 + $0x18] sm:$0xf]
        %v446 = vld [vmem:[%s4 + $0x1c] sm:$0xf]
        %v447 = vld [vmem:[%s4 + $0x20] sm:$0xf]
        %v448 = vld [vmem:[%s4 + $0x24] sm:$0xf]
        %v449 = vld [vmem:[%s4 + $0x28] sm:$0xf]
        %v450 = vld [vmem:[%s4 + $0x2c] sm:$0xf]
        %v451 = vld [vmem:[%s4 + $0x30] sm:$0xf]
        %v452 = vld [vmem:[%s4 + $0x34] sm:$0xf]
        %v453 = vld [vmem:[%s4 + $0x38] sm:$0xf]
        %v454 = vld [vmem:[%s4 + $0x3c] sm:$0xf]
        %v471 = vunpack.c.l.b16 %v439
        %v472 = vunpack.c.l.b16 %v440
        %v473 = vunpack.c.l.b16 %v441
        %v474 = vunpack.c.l.b16 %v442
        %v475 = vunpack.c.l.b16 %v443
        %v476 = vunpack.c.l.b16 %v444
        %v477 = vunpack.c.l.b16 %v445
        %v478 = vunpack.c.l.b16 %v446
        %v479 = vunpack.c.l.b16 %v447
        %v480 = vunpack.c.l.b16 %v448
        %v481 = vunpack.c.l.b16 %v449
        %v482 = vunpack.c.l.b16 %v450
        %v483 = vunpack.c.l.b16 %v451
        %v484 = vunpack.c.l.b16 %v452
        %v485 = vunpack.c.l.b16 %v453
        %v486 = vunpack.c.l.b16 %v454
        %v487 = vpack.c.b16 %v472, %v471
        %v488 = vpack.c.b16 %v474, %v473
        %v489 = vpack.c.b16 %v476, %v475
        %v490 = vpack.c.b16 %v478, %v477
        %v491 = vpack.c.b16 %v480, %v479
        %v492 = vpack.c.b16 %v482, %v481
        %v493 = vpack.c.b16 %v484, %v483
        %v494 = vpack.c.b16 %v486, %v485
        %503 = vmatprep.subr.bf16.mxu0 0
        %504 = vmatpush1.bf16.msra.mxu0 %v494
        %505 = vmatprep.subr.bf16.mxu0 0
        %506 = vmatpush1.bf16.msra.mxu0 %v493
        %507 = vmatprep.subr.bf16.mxu0 0
        %508 = vmatpush1.bf16.msra.mxu0 %v492
        %509 = vmatprep.subr.bf16.mxu0 0
        %510 = vmatpush1.bf16.msra.mxu0 %v491
        %511 = vmatprep.subr.bf16.mxu0 0
        %512 = vmatpush1.bf16.msra.mxu0 %v490
        %513 = vmatprep.subr.bf16.mxu0 0
        %514 = vmatpush1.bf16.msra.mxu0 %v489
        %515 = vmatprep.subr.bf16.mxu0 0
        %516 = vmatpush1.bf16.msra.mxu0 %v488
        %517 = vmatprep.subr.bf16.mxu0 0
        %518 = vmatpush1.bf16.msra.mxu0 %v487
        %519 = vmatprep.subr.bf16.mxu0 0
        %520 = vmatpush2.bf16.msra.mxu0 0
        %521 = vmatprep.subr.bf16.mxu0 0
        %522 = vmatpush2.bf16.msra.mxu0 0
        %523 = vmatprep.subr.bf16.mxu0 0
        %524 = vmatpush2.bf16.msra.mxu0 0
        %525 = vmatprep.subr.bf16.mxu0 0
        %526 = vmatpush2.bf16.msra.mxu0 0
        %527 = vmatprep.subr.bf16.mxu0 0
        %528 = vmatpush2.bf16.msra.mxu0 0
        %529 = vmatprep.subr.bf16.mxu0 0
        %530 = vmatpush2.bf16.msra.mxu0 0
        %531 = vmatprep.subr.bf16.mxu0 0
        %532 = vmatpush2.bf16.msra.mxu0 0
        %533 = vmatprep.subr.bf16.mxu0 0
        %534 = vmatpush2.bf16.msra.mxu0 0
        %535 = vmatprep.mubr.bf16.mxu0 0
        %536 = vmatmul.mubr.bf16.gmra.mxu0 %v438
        %v537 = vpop.f32.mrf.mxu0
        %v538 = vadd.f32 0.0, %v537
        %v539 = vpop.f32.mrf.mxu0
        %v540 = vpop.f32.mrf.mxu0
        %v541 = vpop.f32.mrf.mxu0
        %542 = vdwg.mxu0
        %v543 = vld [vmem:[%s5] sm:$0xff]
        %v544 = vadd.f32 %v538, %v543
        %v545 = vpack.c.bf16 %v544, %v544
        %546 = vst.msk [vmem:[#allocation3] sm:$0xf] %vm433, %v545
        %v548 = vunpack.c.l.b16 %v545
        %v549 = vpack.c.b16 %v548, %v548
        %550 = vrot.lane.b32.xlu0 %v549, 96
        %v551 = vpop.permute.xlu0 %550
        %553 = vst.msk [vmem:[#allocation4] sm:$0xf] %vm433, %v551
        %v554 = vld [vmem:[#allocation2] sm:$0xf]
        %v555 = vld [vmem:[#allocation2 + $0x4] sm:$0xf]
        %v556 = vld [vmem:[#allocation2 + $0x8] sm:$0xf]
        %v557 = vld [vmem:[#allocation2 + $0xc] sm:$0xf]
        %v558 = vld [vmem:[#allocation3] sm:$0xf]
        %v563 = vunpack.c.l.b16 %v554
        %v564 = vunpack.c.l.b16 %v555
        %v565 = vunpack.c.l.b16 %v556
        %v566 = vunpack.c.l.b16 %v557
        %v567 = vpack.c.b16 %v564, %v563
        %v568 = vpack.c.b16 %v566, %v565
        %v570 = vsel %vm361, %v567, 0
        %v573 = vsel %vm361, %v568, 0
        %v576 = vsel %vm361, %v558, 0
        %578 = vmatprep.subr.bf16.mxu0 0
        %579 = vmatpush1.bf16.xpose.msra.mxu0 0
        %580 = vmatprep.subr.bf16.mxu0 0
        %581 = vmatpush1.bf16.xpose.msra.mxu0 0
        %582 = vmatprep.subr.bf16.mxu0 0
        %583 = vmatpush1.bf16.xpose.msra.mxu0 0
        %584 = vmatprep.subr.bf16.mxu0 0
        %585 = vmatpush1.bf16.xpose.msra.mxu0 0
        %586 = vmatprep.subr.bf16.mxu0 0
        %587 = vmatpush1.bf16.xpose.msra.mxu0 0
        %588 = vmatprep.subr.bf16.mxu0 0
        %589 = vmatpush1.bf16.xpose.msra.mxu0 0
        %590 = vmatprep.subr.bf16.mxu0 0
        %591 = vmatpush1.bf16.xpose.msra.mxu0 0
        %592 = vmatprep.subr.bf16.mxu0 0
        %593 = vmatpush1.bf16.xpose.msra.mxu0 %v576
        %594 = vmatprep.subr.bf16.mxu0 0
        %595 = vmatpush2.bf16.xpose.msra.mxu0 0
        %596 = vmatprep.subr.bf16.mxu0 0
        %597 = vmatpush2.bf16.xpose.msra.mxu0 0
        %598 = vmatprep.subr.bf16.mxu0 0
        %599 = vmatpush2.bf16.xpose.msra.mxu0 0
        %600 = vmatprep.subr.bf16.mxu0 0
        %601 = vmatpush2.bf16.xpose.msra.mxu0 0
        %602 = vmatprep.subr.bf16.mxu0 0
        %603 = vmatpush2.bf16.xpose.msra.mxu0 0
        %604 = vmatprep.subr.bf16.mxu0 0
        %605 = vmatpush2.bf16.xpose.msra.mxu0 0
        %606 = vmatprep.subr.bf16.mxu0 0
        %607 = vmatpush2.bf16.xpose.msra.mxu0 0
        %608 = vmatprep.subr.bf16.mxu0 0
        %609 = vmatpush2.bf16.xpose.msra.mxu0 0
        %610 = vmatprep.mubr.bf16.mxu0 0
        %611 = vmatmul.mubr.bf16.gmra.mxu0 %v570
        %v612 = vpop.f32.mrf.mxu0
        %v613 = vadd.f32 0.0, %v612
        %v614 = vpop.f32.mrf.mxu0
        %v615 = vpop.f32.mrf.mxu0
        %v616 = vadd.f32 0.0, %v615
        %v617 = vpop.f32.mrf.mxu0
        %618 = vmatprep.mubr.bf16.mxu0 0
        %619 = vmatmul.mubr.bf16.gmra.mxu0 %v573
        %v620 = vpop.f32.mrf.mxu0
        %v621 = vadd.f32 0.0, %v620
        %v622 = vpop.f32.mrf.mxu0
        %v623 = vpop.f32.mrf.mxu0
        %v624 = vadd.f32 0.0, %v623
        %v625 = vpop.f32.mrf.mxu0
        %626 = vdwg.mxu0
        %v627 = vlaneseq
        %v628 = vshrl.u32 %v627, 7
        %v629 = vadd.s32 %v628, 8
        %v630 = vadd.s32 %v628, 16
        %v631 = vadd.s32 %v628, 24
        %v632 = vlaneseq
        %v633 = vand.u32 %v632, 127
        %vm634 = vcmp.lt.s32.totalorder %v633, 4
        %vm635 = vcmp.le.s32.totalorder %v633, %v628
        %vm636 = vcmp.le.s32.totalorder %v633, %v629
        %vm637 = vcmp.le.s32.totalorder %v633, %v630
        %vm638 = vcmp.le.s32.totalorder %v633, %v631
        %vm639 = vmand %vm634, %vm635
        %vm640 = vmand %vm634, %vm636
        %vm641 = vmand %vm634, %vm637
        %vm642 = vmand %vm634, %vm638
        %v643 = vsel %vm639, %v613, -1e+30
        %v644 = vsel %vm640, %v616, -1e+30
        %v645 = vsel %vm641, %v621, -1e+30
        %v646 = vsel %vm642, %v624, -1e+30
        %vm647 = vcmask 64512
        %v648 = vsel %vm647, %v643, -inf
        %649 = vmax.xlane.f32.xlu0 %v648
        %v650 = vpop.xlane.xlu0 %649
        %v651 = vsel %vm647, %v644, -inf
        %652 = vmax.xlane.f32.xlu0 %v651
        %v653 = vpop.xlane.xlu0 %652
        %v654 = vsel %vm647, %v645, -inf
        %655 = vmax.xlane.f32.xlu0 %v654
        %v656 = vpop.xlane.xlu0 %655
        %v657 = vsel %vm647, %v646, -inf
        %658 = vmax.xlane.f32.xlu0 %v657
        %v659 = vpop.xlane.xlu0 %658
        %v660 = vsub.f32 %v643, %v650
        %v661 = vsub.f32 %v644, %v653
        %v662 = vsub.f32 %v645, %v656
        %v663 = vsub.f32 %v646, %v659
        %v664 = vmul.f32 %v660, 1.442695
        %v665 = vpow.pop %v664
        %v666 = vmul.f32 %v661, 1.442695
        %v667 = vpow.pop %v666
        %v668 = vmul.f32 %v662, 1.442695
        %v669 = vpow.pop %v668
        %v670 = vmul.f32 %v663, 1.442695
        %v671 = vpow.pop %v670
        %v672 = vsel %vm647, %v665, 0.0
        %673 = vadd.xlane.f32.xlu0 %v672
        %v674 = vpop.xlane.xlu0 %673
        %v675 = vsel %vm647, %v667, 0.0
        %676 = vadd.xlane.f32.xlu0 %v675
        %v677 = vpop.xlane.xlu0 %676
        %v678 = vsel %vm647, %v669, 0.0
        %679 = vadd.xlane.f32.xlu0 %v678
        %v680 = vpop.xlane.xlu0 %679
        %v681 = vsel %vm647, %v671, 0.0
        %682 = vadd.xlane.f32.xlu0 %v681
        %v683 = vpop.xlane.xlu0 %682
        %v684 = vrcp.pop %v674
        %v685 = vrcp.pop %v677
        %v686 = vrcp.pop %v680
        %v687 = vrcp.pop %v683
        %v688 = vmul.f32 %v665, %v684
        %v689 = vmul.f32 %v667, %v685
        %v690 = vmul.f32 %v669, %v686
        %v691 = vmul.f32 %v671, %v687
        %v692 = vpack.c.bf16 %v689, %v688
        %v693 = vpack.c.bf16 %v691, %v690
        %v694 = vld [vmem:[#allocation4] sm:$0xf]
        %v696 = vsel %vm647, %v692, 0
        %v699 = vsel %vm647, %v693, 0
        %vm701 = vcmask 1043456
        %v703 = vsel %vm701, %v694, 0
        %705 = vmatprep.subr.bf16.mxu0 0
        %706 = vmatpush1.bf16.msra.mxu0 0
        %707 = vmatprep.subr.bf16.mxu0 0
        %708 = vmatpush1.bf16.msra.mxu0 0
        %709 = vmatprep.subr.bf16.mxu0 0
        %710 = vmatpush1.bf16.msra.mxu0 0
        %711 = vmatprep.subr.bf16.mxu0 0
        %712 = vmatpush1.bf16.msra.mxu0 0
        %713 = vmatprep.subr.bf16.mxu0 0
        %714 = vmatpush1.bf16.msra.mxu0 0
        %715 = vmatprep.subr.bf16.mxu0 0
        %716 = vmatpush1.bf16.msra.mxu0 0
        %717 = vmatprep.subr.bf16.mxu0 0
        %718 = vmatpush1.bf16.msra.mxu0 0
        %719 = vmatprep.subr.bf16.mxu0 0
        %720 = vmatpush1.bf16.msra.mxu0 %v703
        %721 = vmatprep.subr.bf16.mxu0 0
        %722 = vmatpush2.bf16.msra.mxu0 0
        %723 = vmatprep.subr.bf16.mxu0 0
        %724 = vmatpush2.bf16.msra.mxu0 0
        %725 = vmatprep.subr.bf16.mxu0 0
        %726 = vmatpush2.bf16.msra.mxu0 0
        %727 = vmatprep.subr.bf16.mxu0 0
        %728 = vmatpush2.bf16.msra.mxu0 0
        %729 = vmatprep.subr.bf16.mxu0 0
        %730 = vmatpush2.bf16.msra.mxu0 0
        %731 = vmatprep.subr.bf16.mxu0 0
        %732 = vmatpush2.bf16.msra.mxu0 0
        %733 = vmatprep.subr.bf16.mxu0 0
        %734 = vmatpush2.bf16.msra.mxu0 0
        %735 = vmatprep.subr.bf16.mxu0 0
        %736 = vmatpush2.bf16.msra.mxu0 0
        %737 = vmatprep.mubr.bf16.mxu0 0
        %738 = vmatmul.mubr.bf16.gmra.mxu0 %v696
        %v739 = vpop.f32.mrf.mxu0
        %v740 = vadd.f32 0.0, %v739
        %v741 = vpop.f32.mrf.mxu0
        %v742 = vpop.f32.mrf.mxu0
        %v743 = vadd.f32 0.0, %v742
        %v744 = vpop.f32.mrf.mxu0
        %745 = vmatprep.mubr.bf16.mxu0 0
        %746 = vmatmul.mubr.bf16.gmra.mxu0 %v699
        %v747 = vpop.f32.mrf.mxu0
        %v748 = vadd.f32 0.0, %v747
        %v749 = vpop.f32.mrf.mxu0
        %v750 = vpop.f32.mrf.mxu0
        %v751 = vadd.f32 0.0, %v750
        %v752 = vpop.f32.mrf.mxu0
        %753 = vdwg.mxu0
        %v754 = vpack.c.bf16 %v743, %v740
        %v755 = vpack.c.bf16 %v751, %v748
        %v756 = vld [vmem:[%s6] sm:$0xf]
        %v757 = vld [vmem:[%s6 + $0x4] sm:$0xf]
        %v758 = vld [vmem:[%s6 + $0x8] sm:$0xf]
        %v759 = vld [vmem:[%s6 + $0xc] sm:$0xf]
        %v760 = vld [vmem:[%s7] sm:$0x1]
        %v762 = vlaneseq
        %v763 = vshrl.u32 %v762, 7
        %v764 = vsub.s32 0, %v763
        %v765 = vrot.slane %v760, %v764
        %v771 = vunpack.c.l.b16 %v756
        %v772 = vunpack.c.l.b16 %v757
        %v773 = vunpack.c.l.b16 %v758
        %v774 = vunpack.c.l.b16 %v759
        %v775 = vpack.c.b16 %v772, %v771
        %v776 = vpack.c.b16 %v774, %v773
        %v780 = vsel %vm361, %v754, 0
        %v783 = vsel %vm361, %v755, 0
        %785 = vmatprep.subr.bf16.mxu0 0
        %786 = vmatpush1.bf16.msra.mxu0 0
        %787 = vmatprep.subr.bf16.mxu0 0
        %788 = vmatpush1.bf16.msra.mxu0 0
        %789 = vmatprep.subr.bf16.mxu0 0
        %790 = vmatpush1.bf16.msra.mxu0 0
        %791 = vmatprep.subr.bf16.mxu0 0
        %792 = vmatpush1.bf16.msra.mxu0 0
        %793 = vmatprep.subr.bf16.mxu0 0
        %794 = vmatpush1.bf16.msra.mxu0 0
        %795 = vmatprep.subr.bf16.mxu0 0
        %796 = vmatpush1.bf16.msra.mxu0 0
        %797 = vmatprep.subr.bf16.mxu0 0
        %798 = vmatpush1.bf16.msra.mxu0 %v776
        %799 = vmatprep.subr.bf16.mxu0 0
        %800 = vmatpush1.bf16.msra.mxu0 %v775
        %801 = vmatprep.subr.bf16.mxu0 0
        %802 = vmatpush2.bf16.msra.mxu0 0
        %803 = vmatprep.subr.bf16.mxu0 0
        %804 = vmatpush2.bf16.msra.mxu0 0
        %805 = vmatprep.subr.bf16.mxu0 0
        %806 = vmatpush2.bf16.msra.mxu0 0
        %807 = vmatprep.subr.bf16.mxu0 0
        %808 = vmatpush2.bf16.msra.mxu0 0
        %809 = vmatprep.subr.bf16.mxu0 0
        %810 = vmatpush2.bf16.msra.mxu0 0
        %811 = vmatprep.subr.bf16.mxu0 0
        %812 = vmatpush2.bf16.msra.mxu0 0
        %813 = vmatprep.subr.bf16.mxu0 0
        %814 = vmatpush2.bf16.msra.mxu0 0
        %815 = vmatprep.subr.bf16.mxu0 0
        %816 = vmatpush2.bf16.msra.mxu0 0
        %817 = vmatprep.mubr.bf16.mxu0 0
        %818 = vmatmul.mubr.bf16.gmra.mxu0 %v780
        %v819 = vpop.f32.mrf.mxu0
        %v820 = vadd.f32 %v765, %v819
        %v821 = vpop.f32.mrf.mxu0
        %v822 = vpop.f32.mrf.mxu0
        %v823 = vadd.f32 %v765, %v822
        %v824 = vpop.f32.mrf.mxu0
        %825 = vmatprep.mubr.bf16.mxu0 0
        %826 = vmatmul.mubr.bf16.gmra.mxu0 %v783
        %v827 = vpop.f32.mrf.mxu0
        %v828 = vadd.f32 %v765, %v827
        %v829 = vpop.f32.mrf.mxu0
        %v830 = vpop.f32.mrf.mxu0
        %v831 = vadd.f32 %v765, %v830
        %v832 = vpop.f32.mrf.mxu0
        %833 = vdwg.mxu0
        %834 = vst.msk [vmem:[%s312] sm:$0xff] %vm361, %v820
        %835 = vst.msk [vmem:[%s312 + $0x8] sm:$0xff] %vm361, %v823
        %836 = vst.msk [vmem:[%s312 + $0x10] sm:$0xff] %vm361, %v828
        %837 = vst.msk [vmem:[%s312 + $0x18] sm:$0xff] %vm361, %v831
        %s838 = sand.u32 %s208, 1
        %s839 = scalar_lea.sflag [#allocation6], %s838
        %s840 = sand.u32 %s208, 1
        %s841 = smul.addr %s840, 32
        %s842 = scalar_lea.vmem [#allocation5], %s841
        // Predicated region
        $region53: #{tpu_custom_call.1} parent=51 // pred_check
          %p843 = pneg %p218
        $region54: #{tpu_custom_call.1} parent=51 // pred_check_branch
          %845 = sbr.rel (%p843) target = $region56
        $region55: #{tpu_custom_call.1} parent=51 // pred_region
          %s847 = ssub.s32 512, 512
          %848 = vsyncadd %s839, %s847
          %s849 = smul.addr %s22, 4
          %s850 = smul.addr %s849, 128
          %s851 = scalar_lea.hbm %s8, %s850
          %s852 = sshll.u32 %s842, 4
          %s853 = int_to_ptr.vmem [resolvable:$true] %s852
          %858 = dma.vmem_to_hbm [thread:$0]  %s853, 512, %s851, %s839, 128, 128, 8
        $region56: #{tpu_custom_call.1} parent=51 // pred_fallthru
          _
      $region52: #{tpu_custom_call.1} parent=5 // pred_fallthru
        _
      %p859 = scmp.le.s32.totalorder 2, %s17
      // Predicated region
      $region57: #{tpu_custom_call.1} parent=5 // pred_check
        %p860 = pneg %p859
      $region58: #{tpu_custom_call.1} parent=5 // pred_check_branch
        %862 = sbr.rel (%p860) target = $region60
      $region59: #{tpu_custom_call.1} parent=5 // pred_region
        %s863 = ssub.s32 %s17, 2
        // Predicated region
        $region61: #{tpu_custom_call.1} parent=59 // pred_check
          %p864 = pneg %p224
        $region62: #{tpu_custom_call.1} parent=59 // pred_check_branch
          %866 = sbr.rel (%p864) target = $region64
        $region63: #{tpu_custom_call.1} parent=59 // pred_region
          %s867 = sand.u32 %s209, 1
          %s868 = scalar_lea.sflag [#allocation6], %s867
          %s869 = sand.u32 %s209, 1
          %s870 = smul.addr %s869, 32
          %s871 = scalar_lea.vmem [#allocation5], %s870
          %872 = dma.done %s868, 512
        $region64: #{tpu_custom_call.1} parent=59 // pred_fallthru
          _
      $region60: #{tpu_custom_call.1} parent=5 // pred_fallthru
        _
    $region6: #{tpu_custom_call.1} parent=1 // loop_footer
      %s21 = sadd.s32 1, %s17
    $region7: #{tpu_custom_call.1} parent=1 // loop_footer_branch
      %16 = sbr.rel target = $region3
    $region8: #{tpu_custom_call.1} parent=1 // loop_exit
      _
    %873 = vsyncpa [#allocation6], 1
    %s874 = scalar_lea.sflag [#allocation6], 1
    %875 = vsyncpa %s874, 1

// kernel: tpu_custom_call.1
$region0: #{tpu_custom_call.1}
  #allocation0 [shape = 'u32[]', space=smem, size = 0x4, offset = 0x4, fixed_abs, tag = 'smem constant byte address 0x4 - core index']
  #allocation1 [shape = 'u32[144,128]{1,0:T(1,128)}', space=vmem, size = 0x12000, scoped, tag = 'internal scratch']
  #allocation2 [shape = 'bf16[1,32,32]{2,1,0:T(8,128)(2,1)}', space=vmem, size = 0x2000, scoped, tag = 'scratch operand']
  #allocation3 [shape = 'bf16[1,8,32]{2,1,0:T(8,128)(2,1)}', space=vmem, size = 0x800, scoped, tag = 'scratch operand']
  #allocation4 [shape = 'bf16[1,8,32]{2,1,0:T(8,128)(2,1)}', space=vmem, size = 0x800, scoped, tag = 'scratch operand']
  %s0 = inlined_call_operand.vmem [shape: bf16[64,32], index: 0, kind: input, shape index: {}]
  %s1 = inlined_call_operand.vmem [shape: bf16[16,128], index: 1, kind: input, shape index: {}]
  %s2 = inlined_call_operand.vmem [shape: bf16[32,32], index: 2, kind: input, shape index: {}]
  %s3 = inlined_call_operand.vmem [shape: f32[1,32], index: 3, kind: input, shape index: {}]
  %s4 = inlined_call_operand.vmem [shape: bf16[128,64], index: 4, kind: input, shape index: {}]
  %s5 = inlined_call_operand.vmem [shape: f32[8,64], index: 5, kind: input, shape index: {}]
  %s6 = inlined_call_operand.vmem [shape: bf16[32,32], index: 6, kind: input, shape index: {}]
  %s7 = inlined_call_operand.vmem [shape: f32[1,32], index: 7, kind: input, shape index: {}]
  %s8 = inlined_call_operand.hbm [shape: f32[2,32,32], index: 8, kind: output, shape index: {}]
  %s9 = sld [smem:[#allocation0]]
  $region65: #{tpu_custom_call.1} parent=0
    _
  %s11 = ssub.s32 1, %s9
  %s12 = scalar_select 0, %s11, %s9
  $region1: #{tpu_custom_call.1} parent=0
    #allocation5 [shape = 'u8[32768]{0}', space=vmem, size = 0x8000, scoped, tag = 'output window, operand 0']
    #allocation6 [shape = 's32[2]{0}', space=sflag, size = 0x8, scoped, tag = 'scoped memory for tpu_custom_call.1']
    %13 = vsyncpa [#allocation6], 0
    %s14 = scalar_lea.sflag [#allocation6], 1
    %15 = vsyncpa %s14, 0
    loop: start=0, step=1, limit=4
    $region2: #{tpu_custom_call.1} parent=1 // loop_pre_header
      _
    $region3: #{tpu_custom_call.1} parent=1 // loop_header
      %s17 = sphi 0, %s21
      %p18 = scmp.ge.s32.totalorder %s17, 4
      %s27 = sphi 0, %s29
      %s30 = sphi 0, %s27
      %s31 = sphi 0, %s30
      %s47 = sphi 0, %s31
      %s53 = sphi 0, %s55
      %s56 = sphi 0, %s53
      %s57 = sphi 0, %s56
      %s73 = sphi 0, %s57
      %s77 = sphi 0, %s77
      %s79 = sphi 0, %s77
      %s80 = sphi 0, %s79
      %s94 = sphi 0, %s80
      %s98 = sphi 0, %s98
      %s100 = sphi 0, %s98
      %s101 = sphi 0, %s100
      %s115 = sphi 0, %s101
      %s119 = sphi 0, %s119
      %s121 = sphi 0, %s119
      %s122 = sphi 0, %s121
      %s136 = sphi 0, %s122
      %s140 = sphi 0, %s140
      %s142 = sphi 0, %s140
      %s143 = sphi 0, %s142
      %s157 = sphi 0, %s143
      %s161 = sphi 0, %s161
      %s163 = sphi 0, %s161
      %s164 = sphi 0, %s163
      %s178 = sphi 0, %s164
      %s182 = sphi 0, %s182
      %s184 = sphi 0, %s182
      %s185 = sphi 0, %s184
      %s199 = sphi 0, %s185
      %s205 = sphi 0, %s207
      %s208 = sphi 0, %s205
      %s209 = sphi 0, %s208
      %s225 = sphi 0, %s209
    $region4: #{tpu_custom_call.1} parent=1 // loop_header_branch
      %20 = sbr.rel (%p18) target = $region8
    $region5: #{tpu_custom_call.1} parent=1 // loop_body
      %s22 = ssub.s32 %s17, 1
      %s23 = ssub.s32 %s17, 2
      %s24 = sadd.s32 %s17, 1
      %s25 = ssub.s32 %s17, %s24
      %p26 = scmp.eq.s32.totalorder %s25, 0
      %s28 = sadd.s32 %s27, 1
      %s29 = scalar_select %p26, %s27, %s28
      %p32 = pneg %p26
      %p33 = scmp.eq.s32.totalorder %s17, 1
      %p34 = por %p32, %p33
      %p35 = scmp.ne.s32.totalorder %s27, %s30
      %p36 = scmp.eq.s32.totalorder %s17, 0
      %p37 = por %p35, %p36
      %p38 = scmp.ne.s32.totalorder %s27, %s30
      %p39 = scmp.eq.s32.totalorder %s22, 1
      %p40 = por %p38, %p39
      %p41 = scmp.ne.s32.totalorder %s30, %s31
      %p42 = scmp.eq.s32.totalorder %s22, 0
      %p43 = por %p41, %p42
      %p44 = scmp.ne.s32.totalorder %s30, %s31
      %p45 = scmp.eq.s32.totalorder %s23, 1
      %p46 = por %p44, %p45
      %p48 = scmp.ne.s32.totalorder %s31, %s47
      %p49 = scmp.eq.s32.totalorder %s23, 0
      %p50 = por %p48, %p49
      %s51 = ssub.s32 %s17, %s24
      %p52 = scmp.eq.s32.totalorder %s51, 0
      %s54 = sadd.s32 %s53, 1
      %s55 = scalar_select %p52, %s53, %s54
      %p58 = pneg %p52
      %p59 = scmp.eq.s32.totalorder %s17, 1
      %p60 = por %p58, %p59
      %p61 = scmp.ne.s32.totalorder %s53, %s56
      %p62 = scmp.eq.s32.totalorder %s17, 0
      %p63 = por %p61, %p62
      %p64 = scmp.ne.s32.totalorder %s53, %s56
      %p65 = scmp.eq.s32.totalorder %s22, 1
      %p66 = por %p64, %p65
      %p67 = scmp.ne.s32.totalorder %s56, %s57
      %p68 = scmp.eq.s32.totalorder %s22, 0
      %p69 = por %p67, %p68
      %p70 = scmp.ne.s32.totalorder %s56, %s57
      %p71 = scmp.eq.s32.totalorder %s23, 1
      %p72 = por %p70, %p71
      %p74 = scmp.ne.s32.totalorder %s57, %s73
      %p75 = scmp.eq.s32.totalorder %s23, 0
      %p76 = por %p74, %p75
      %s78 = sadd.s32 %s77, 1
      %p81 = scmp.eq.s32.totalorder %s17, 1
      %p82 = scmp.ne.s32.totalorder %s77, %s79
      %p83 = scmp.eq.s32.totalorder %s17, 0
      %p84 = por %p82, %p83
      %p85 = scmp.ne.s32.totalorder %s77, %s79
      %p86 = scmp.eq.s32.totalorder %s22, 1
      %p87 = por %p85, %p86
      %p88 = scmp.ne.s32.totalorder %s79, %s80
      %p89 = scmp.eq.s32.totalorder %s22, 0
      %p90 = por %p88, %p89
      %p91 = scmp.ne.s32.totalorder %s79, %s80
      %p92 = scmp.eq.s32.totalorder %s23, 1
      %p93 = por %p91, %p92
      %p95 = scmp.ne.s32.totalorder %s80, %s94
      %p96 = scmp.eq.s32.totalorder %s23, 0
      %p97 = por %p95, %p96
      %s99 = sadd.s32 %s98, 1
      %p102 = scmp.eq.s32.totalorder %s17, 1
      %p103 = scmp.ne.s32.totalorder %s98, %s100
      %p104 = scmp.eq.s32.totalorder %s17, 0
      %p105 = por %p103, %p104
      %p106 = scmp.ne.s32.totalorder %s98, %s100
      %p107 = scmp.eq.s32.totalorder %s22, 1
      %p108 = por %p106, %p107
      %p109 = scmp.ne.s32.totalorder %s100, %s101
      %p110 = scmp.eq.s32.totalorder %s22, 0
      %p111 = por %p109, %p110
      %p112 = scmp.ne.s32.totalorder %s100, %s101
      %p113 = scmp.eq.s32.totalorder %s23, 1
      %p114 = por %p112, %p113
      %p116 = scmp.ne.s32.totalorder %s101, %s115
      %p117 = scmp.eq.s32.totalorder %s23, 0
      %p118 = por %p116, %p117
      %s120 = sadd.s32 %s119, 1
      %p123 = scmp.eq.s32.totalorder %s17, 1
      %p124 = scmp.ne.s32.totalorder %s119, %s121
      %p125 = scmp.eq.s32.totalorder %s17, 0
      %p126 = por %p124, %p125
      %p127 = scmp.ne.s32.totalorder %s119, %s121
      %p128 = scmp.eq.s32.totalorder %s22, 1
      %p129 = por %p127, %p128
      %p130 = scmp.ne.s32.totalorder %s121, %s122
      %p131 = scmp.eq.s32.totalorder %s22, 0
      %p132 = por %p130, %p131
      %p133 = scmp.ne.s32.totalorder %s121, %s122
      %p134 = scmp.eq.s32.totalorder %s23, 1
      %p135 = por %p133, %p134
      %p137 = scmp.ne.s32.totalorder %s122, %s136
      %p138 = scmp.eq.s32.totalorder %s23, 0
      %p139 = por %p137, %p138
      %s141 = sadd.s32 %s140, 1
      %p144 = scmp.eq.s32.totalorder %s17, 1
      %p145 = scmp.ne.s32.totalorder %s140, %s142
      %p146 = scmp.eq.s32.totalorder %s17, 0
      %p147 = por %p145, %p146
      %p148 = scmp.ne.s32.totalorder %s140, %s142
      %p149 = scmp.eq.s32.totalorder %s22, 1
      %p150 = por %p148, %p149
      %p151 = scmp.ne.s32.totalorder %s142, %s143
      %p152 = scmp.eq.s32.totalorder %s22, 0
      %p153 = por %p151, %p152
      %p154 = scmp.ne.s32.totalorder %s142, %s143
      %p155 = scmp.eq.s32.totalorder %s23, 1
      %p156 = por %p154, %p155
      %p158 = scmp.ne.s32.totalorder %s143, %s157
      %p159 = scmp.eq.s32.totalorder %s23, 0
      %p160 = por %p158, %p159
      %s162 = sadd.s32 %s161, 1
      %p165 = scmp.eq.s32.totalorder %s17, 1
      %p166 = scmp.ne.s32.totalorder %s161, %s163
      %p167 = scmp.eq.s32.totalorder %s17, 0
      %p168 = por %p166, %p167
      %p169 = scmp.ne.s32.totalorder %s161, %s163
      %p170 = scmp.eq.s32.totalorder %s22, 1
      %p171 = por %p169, %p170
      %p172 = scmp.ne.s32.totalorder %s163, %s164
      %p173 = scmp.eq.s32.totalorder %s22, 0
      %p174 = por %p172, %p173
      %p175 = scmp.ne.s32.totalorder %s163, %s164
      %p176 = scmp.eq.s32.totalorder %s23, 1
      %p177 = por %p175, %p176
      %p179 = scmp.ne.s32.totalorder %s164, %s178
      %p180 = scmp.eq.s32.totalorder %s23, 0
      %p181 = por %p179, %p180
      %s183 = sadd.s32 %s182, 1
      %p186 = scmp.eq.s32.totalorder %s17, 1
      %p187 = scmp.ne.s32.totalorder %s182, %s184
      %p188 = scmp.eq.s32.totalorder %s17, 0
      %p189 = por %p187, %p188
      %p190 = scmp.ne.s32.totalorder %s182, %s184
      %p191 = scmp.eq.s32.totalorder %s22, 1
      %p192 = por %p190, %p191
      %p193 = scmp.ne.s32.totalorder %s184, %s185
      %p194 = scmp.eq.s32.totalorder %s22, 0
      %p195 = por %p193, %p194
      %p196 = scmp.ne.s32.totalorder %s184, %s185
      %p197 = scmp.eq.s32.totalorder %s23, 1
      %p198 = por %p196, %p197
      %p200 = scmp.ne.s32.totalorder %s185, %s199
      %p201 = scmp.eq.s32.totalorder %s23, 0
      %p202 = por %p200, %p201
      %s203 = ssub.s32 %s17, %s24
      %p204 = scmp.eq.s32.totalorder %s203, 0
      %s206 = sadd.s32 %s205, 1
      %s207 = scalar_select %p204, %s205, %s206
      %p210 = pneg %p204
      %p211 = scmp.eq.s32.totalorder %s17, 1
      %p212 = por %p210, %p211
      %p213 = scmp.ne.s32.totalorder %s205, %s208
      %p214 = scmp.eq.s32.totalorder %s17, 0
      %p215 = por %p213, %p214
      %p216 = scmp.ne.s32.totalorder %s205, %s208
      %p217 = scmp.eq.s32.totalorder %s22, 1
      %p218 = por %p216, %p217
      %p219 = scmp.ne.s32.totalorder %s208, %s209
      %p220 = scmp.eq.s32.totalorder %s22, 0
      %p221 = por %p219, %p220
      %p222 = scmp.ne.s32.totalorder %s208, %s209
      %p223 = scmp.eq.s32.totalorder %s23, 1
      %p224 = por %p222, %p223
      %p226 = scmp.ne.s32.totalorder %s209, %s225
      %p227 = scmp.eq.s32.totalorder %s23, 0
      %p228 = por %p226, %p227
      %p229 = scmp.le.s32.totalorder 1, %s17
      %p230 = scmp.lt.s32.totalorder %s17, 3
      %p231 = pnand %p229, %p230
      %p232 = pneg %p231
      // Predicated region
      $region9: #{tpu_custom_call.1} parent=5 // pred_check
        _
      $region10: #{tpu_custom_call.1} parent=5 // pred_check_branch
        %234 = sbr.rel (%p231) target = $region12
      $region11: #{tpu_custom_call.1} parent=5 // pred_region
        %s235 = ssub.s32 %s17, 1
        // Predicated region
        $region13: #{tpu_custom_call.1} parent=11 // pred_check
          %p236 = pneg %p90
        $region14: #{tpu_custom_call.1} parent=11 // pred_check_branch
          %238 = sbr.rel (%p236) target = $region16
        $region15: #{tpu_custom_call.1} parent=11 // pred_region
          _
        $region16: #{tpu_custom_call.1} parent=11 // pred_fallthru
          _
        // Predicated region
        $region17: #{tpu_custom_call.1} parent=11 // pred_check
          %p239 = pneg %p111
        $region18: #{tpu_custom_call.1} parent=11 // pred_check_branch
          %241 = sbr.rel (%p239) target = $region20
        $region19: #{tpu_custom_call.1} parent=11 // pred_region
          _
        $region20: #{tpu_custom_call.1} parent=11 // pred_fallthru
          _
        // Predicated region
        $region21: #{tpu_custom_call.1} parent=11 // pred_check
          %p242 = pneg %p132
        $region22: #{tpu_custom_call.1} parent=11 // pred_check_branch
          %244 = sbr.rel (%p242) target = $region24
        $region23: #{tpu_custom_call.1} parent=11 // pred_region
          _
        $region24: #{tpu_custom_call.1} parent=11 // pred_fallthru
          _
        // Predicated region
        $region25: #{tpu_custom_call.1} parent=11 // pred_check
          %p245 = pneg %p153
        $region26: #{tpu_custom_call.1} parent=11 // pred_check_branch
          %247 = sbr.rel (%p245) target = $region28
        $region27: #{tpu_custom_call.1} parent=11 // pred_region
          _
        $region28: #{tpu_custom_call.1} parent=11 // pred_fallthru
          _
        // Predicated region
        $region29: #{tpu_custom_call.1} parent=11 // pred_check
          %p248 = pneg %p174
        $region30: #{tpu_custom_call.1} parent=11 // pred_check_branch
          %250 = sbr.rel (%p248) target = $region32
        $region31: #{tpu_custom_call.1} parent=11 // pred_region
          _
        $region32: #{tpu_custom_call.1} parent=11 // pred_fallthru
          _
        // Predicated region
        $region33: #{tpu_custom_call.1} parent=11 // pred_check
          %p251 = pneg %p195
        $region34: #{tpu_custom_call.1} parent=11 // pred_check_branch
          %253 = sbr.rel (%p251) target = $region36
        $region35: #{tpu_custom_call.1} parent=11 // pred_region
          _
        $region36: #{tpu_custom_call.1} parent=11 // pred_fallthru
          _
      $region12: #{tpu_custom_call.1} parent=5 // pred_fallthru
        _
      %p254 = scmp.lt.s32.totalorder %s17, 2
      // Predicated region
      $region37: #{tpu_custom_call.1} parent=5 // pred_check
        %p255 = pneg %p254
      $region38: #{tpu_custom_call.1} parent=5 // pred_check_branch
        %257 = sbr.rel (%p255) target = $region40
      $region39: #{tpu_custom_call.1} parent=5 // pred_region
        // Predicated region
        $region41: #{tpu_custom_call.1} parent=39 // pred_check
          %p258 = pneg %p37
        $region42: #{tpu_custom_call.1} parent=39 // pred_check_branch
          %260 = sbr.rel (%p258) target = $region44
        $region43: #{tpu_custom_call.1} parent=39 // pred_region
          %s261 = smul.u32 4, %s17
          %p262 = scmp.lt.s32.totalorder %s261, 7
          %s263 = scalar_select %p262, %s261, 7
          %s264 = smul.addr %s263, 4
          %s265 = scalar_lea.vmem %s0, %s264
          %s266 = smul.u32 4, %s17
        $region44: #{tpu_custom_call.1} parent=39 // pred_fallthru
          _
        // Predicated region
        $region45: #{tpu_custom_call.1} parent=39 // pred_check
          %p267 = pneg %p63
        $region46: #{tpu_custom_call.1} parent=39 // pred_check_branch
          %269 = sbr.rel (%p267) target = $region48
        $region47: #{tpu_custom_call.1} parent=39 // pred_region
          %p270 = scmp.lt.s32.totalorder %s17, 1
          %s271 = scalar_select %p270, %s17, 1
          %s272 = smul.addr %s271, 4
          %s273 = scalar_lea.vmem %s1, %s272
        $region48: #{tpu_custom_call.1} parent=39 // pred_fallthru
          _
      $region40: #{tpu_custom_call.1} parent=5 // pred_fallthru
        _
      %p274 = scmp.le.s32.totalorder 1, %s17
      %p275 = scmp.lt.s32.totalorder %s17, 3
      %p276 = pnand %p274, %p275
      %p277 = pneg %p276
      // Predicated region
      $region49: #{tpu_custom_call.1} parent=5 // pred_check
        _
      $region50: #{tpu_custom_call.1} parent=5 // pred_check_branch
        %279 = sbr.rel (%p276) target = $region52
      $region51: #{tpu_custom_call.1} parent=5 // pred_region
        %s280 = ssub.s32 %s17, 1
        %s281 = smul.u32 4, %s22
        %p282 = scmp.lt.s32.totalorder %s281, 7
        %s283 = scalar_select %p282, %s281, 7
        %s284 = smul.addr %s283, 4
        %s285 = scalar_lea.vmem %s0, %s284
        %p286 = pneg %p43
        %p287 = pneg %p40
        %p288 = scmp.lt.s32.totalorder %s22, 1
        %s289 = scalar_select %p288, %s22, 1
        %s290 = smul.addr %s289, 4
        %s291 = scalar_lea.vmem %s1, %s290
        %p292 = pneg %p69
        %p293 = pneg %p66
        %p294 = pneg %p90
        %p295 = pneg %p87
        %p296 = pneg %p111
        %p297 = pneg %p108
        %p298 = pneg %p132
        %p299 = pneg %p129
        %p300 = pneg %p153
        %p301 = pneg %p150
        %p302 = pneg %p174
        %p303 = pneg %p171
        %p304 = pneg %p195
        %p305 = pneg %p192
        %p306 = pneg %p221
        %p307 = pneg %p218
        %s308 = sand.u32 %s208, 1
        %s309 = scalar_lea.sflag [#allocation6], %s308
        %s310 = sand.u32 %s208, 1
        %s311 = smul.addr %s310, 32
        %s312 = scalar_lea.vmem [#allocation5], %s311
        %s313 = smul.u32 4, %s22
        %p314 = scmp.lt.s32.totalorder %s313, 7
        %s315 = scalar_select %p314, %s313, 7
        %s316 = smul.addr %s315, 4
        %s317 = scalar_lea.vmem %s0, %s316
        %s318 = smul.u32 4, %s22
        %p319 = scmp.lt.s32.totalorder %s22, 1
        %s320 = scalar_select %p319, %s22, 1
        %s321 = smul.addr %s320, 4
        %s322 = scalar_lea.vmem %s1, %s321
        %v324 = vld [vmem:[%s317] sm:$0xf]
        %v325 = vld [vmem:[%s317 + $0x4] sm:$0xf]
        %v326 = vld [vmem:[%s317 + $0x8] sm:$0xf]
        %v327 = vld [vmem:[%s317 + $0xc] sm:$0xf]
        %v328 = vld [vmem:[%s2] sm:$0xf]
        %v329 = vld [vmem:[%s2 + $0x4] sm:$0xf]
        %v330 = vld [vmem:[%s2 + $0x8] sm:$0xf]
        %v331 = vld [vmem:[%s2 + $0xc] sm:$0xf]
        %v332 = vld [vmem:[%s3] sm:$0x1]
        %v334 = vlaneseq
        %v335 = vshrl.u32 %v334, 7
        %v336 = vsub.s32 0, %v335
        %v337 = vrot.slane %v332, %v336
        %v343 = vunpack.c.l.b16 %v324
        %v344 = vunpack.c.l.b16 %v325
        %v345 = vunpack.c.l.b16 %v326
        %v346 = vunpack.c.l.b16 %v327
        %v347 = vpack.c.b16 %v344, %v343
        %v348 = vpack.c.b16 %v346, %v345
        %v353 = vunpack.c.l.b16 %v328
        %v354 = vunpack.c.l.b16 %v329
        %v355 = vunpack.c.l.b16 %v330
        %v356 = vunpack.c.l.b16 %v331
        %v357 = vpack.c.b16 %v354, %v353
        %v358 = vpack.c.b16 %v356, %v355
        %vm361 = vcmask 261120
        %v363 = vsel %vm361, %v347, 0
        %v366 = vsel %vm361, %v348, 0
        %368 = vmatprep.subr.bf16.mxu0 0
        %369 = vmatpush1.bf16.msra.mxu0 0
        %370 = vmatprep.subr.bf16.mxu0 0
        %371 = vmatpush1.bf16.msra.mxu0 0
        %372 = vmatprep.subr.bf16.mxu0 0
        %373 = vmatpush1.bf16.msra.mxu0 0
        %374 = vmatprep.subr.bf16.mxu0 0
        %375 = vmatpush1.bf16.msra.mxu0 0
        %376 = vmatprep.subr.bf16.mxu0 0
        %377 = vmatpush1.bf16.msra.mxu0 0
        %378 = vmatprep.subr.bf16.mxu0 0
        %379 = vmatpush1.bf16.msra.mxu0 0
        %380 = vmatprep.subr.bf16.mxu0 0
        %381 = vmatpush1.bf16.msra.mxu0 %v358
        %382 = vmatprep.subr.bf16.mxu0 0
        %383 = vmatpush1.bf16.msra.mxu0 %v357
        %384 = vmatprep.subr.bf16.mxu0 0
        %385 = vmatpush2.bf16.msra.mxu0 0
        %386 = vmatprep.subr.bf16.mxu0 0
        %387 = vmatpush2.bf16.msra.mxu0 0
        %388 = vmatprep.subr.bf16.mxu0 0
        %389 = vmatpush2.bf16.msra.mxu0 0
        %390 = vmatprep.subr.bf16.mxu0 0
        %391 = vmatpush2.bf16.msra.mxu0 0
        %392 = vmatprep.subr.bf16.mxu0 0
        %393 = vmatpush2.bf16.msra.mxu0 0
        %394 = vmatprep.subr.bf16.mxu0 0
        %395 = vmatpush2.bf16.msra.mxu0 0
        %396 = vmatprep.subr.bf16.mxu0 0
        %397 = vmatpush2.bf16.msra.mxu0 0
        %398 = vmatprep.subr.bf16.mxu0 0
        %399 = vmatpush2.bf16.msra.mxu0 0
        %400 = vmatprep.mubr.bf16.mxu0 0
        %401 = vmatmul.mubr.bf16.gmra.mxu0 %v363
        %v402 = vpop.f32.mrf.mxu0
        %v403 = vadd.f32 %v337, %v402
        %v404 = vpop.f32.mrf.mxu0
        %v405 = vpop.f32.mrf.mxu0
        %v406 = vadd.f32 %v337, %v405
        %v407 = vpop.f32.mrf.mxu0
        %408 = vmatprep.mubr.bf16.mxu0 0
        %409 = vmatmul.mubr.bf16.gmra.mxu0 %v366
        %v410 = vpop.f32.mrf.mxu0
        %v411 = vadd.f32 %v337, %v410
        %v412 = vpop.f32.mrf.mxu0
        %v413 = vpop.f32.mrf.mxu0
        %v414 = vadd.f32 %v337, %v413
        %v415 = vpop.f32.mrf.mxu0
        %416 = vdwg.mxu0
        %v417 = vpack.c.bf16 %v406, %v403
        %v418 = vpack.c.bf16 %v414, %v411
        %v421 = vunpack.c.l.b16 %v417
        %v422 = vunpack.c.h.b16 %v417
        %v423 = vunpack.c.l.b16 %v418
        %v424 = vunpack.c.h.b16 %v418
        %v425 = vpack.c.b16 %v421, %v421
        %v426 = vpack.c.b16 %v422, %v422
        %v427 = vpack.c.b16 %v423, %v423
        %v428 = vpack.c.b16 %v424, %v424
        %vm433 = vcmask 257024
        %434 = vst.msk [vmem:[#allocation2] sm:$0xf] %vm433, %v425
        %435 = vst.msk [vmem:[#allocation2 + $0x4] sm:$0xf] %vm433, %v426
        %436 = vst.msk [vmem:[#allocation2 + $0x8] sm:$0xf] %vm433, %v427
        %437 = vst.msk [vmem:[#allocation2 + $0xc] sm:$0xf] %vm433, %v428
        %v438 = vld [vmem:[%s322] sm:$0xf]
        %v439 = vld [vmem:[%s4] sm:$0xf]
        %v440 = vld [vmem:[%s4 + $0x4] sm:$0xf]
        %v441 = vld [vmem:[%s4 + $0x8] sm:$0xf]
        %v442 = vld [vmem:[%s4 + $0xc] sm:$0xf]
        %v443 = vld [vmem:[%s4 + $0x10] sm:$0xf]
        %v444 = vld [vmem:[%s4 + $0x14] sm:$0xf]
        %v445 = vld [vmem:[%s4 + $0x18] sm:$0xf]
        %v446 = vld [vmem:[%s4 + $0x1c] sm:$0xf]
        %v447 = vld [vmem:[%s4 + $0x20] sm:$0xf]
        %v448 = vld [vmem:[%s4 + $0x24] sm:$0xf]
        %v449 = vld [vmem:[%s4 + $0x28] sm:$0xf]
        %v450 = vld [vmem:[%s4 + $0x2c] sm:$0xf]
        %v451 = vld [vmem:[%s4 + $0x30] sm:$0xf]
        %v452 = vld [vmem:[%s4 + $0x34] sm:$0xf]
        %v453 = vld [vmem:[%s4 + $0x38] sm:$0xf]
        %v454 = vld [vmem:[%s4 + $0x3c] sm:$0xf]
        %v471 = vunpack.c.l.b16 %v439
        %v472 = vunpack.c.l.b16 %v440
        %v473 = vunpack.c.l.b16 %v441
        %v474 = vunpack.c.l.b16 %v442
        %v475 = vunpack.c.l.b16 %v443
        %v476 = vunpack.c.l.b16 %v444
        %v477 = vunpack.c.l.b16 %v445
        %v478 = vunpack.c.l.b16 %v446
        %v479 = vunpack.c.l.b16 %v447
        %v480 = vunpack.c.l.b16 %v448
        %v481 = vunpack.c.l.b16 %v449
        %v482 = vunpack.c.l.b16 %v450
        %v483 = vunpack.c.l.b16 %v451
        %v484 = vunpack.c.l.b16 %v452
        %v485 = vunpack.c.l.b16 %v453
        %v486 = vunpack.c.l.b16 %v454
        %v487 = vpack.c.b16 %v472, %v471
        %v488 = vpack.c.b16 %v474, %v473
        %v489 = vpack.c.b16 %v476, %v475
        %v490 = vpack.c.b16 %v478, %v477
        %v491 = vpack.c.b16 %v480, %v479
        %v492 = vpack.c.b16 %v482, %v481
        %v493 = vpack.c.b16 %v484, %v483
        %v494 = vpack.c.b16 %v486, %v485
        %503 = vmatprep.subr.bf16.mxu0 0
        %504 = vmatpush1.bf16.msra.mxu0 %v494
        %505 = vmatprep.subr.bf16.mxu0 0
        %506 = vmatpush1.bf16.msra.mxu0 %v493
        %507 = vmatprep.subr.bf16.mxu0 0
        %508 = vmatpush1.bf16.msra.mxu0 %v492
        %509 = vmatprep.subr.bf16.mxu0 0
        %510 = vmatpush1.bf16.msra.mxu0 %v491
        %511 = vmatprep.subr.bf16.mxu0 0
        %512 = vmatpush1.bf16.msra.mxu0 %v490
        %513 = vmatprep.subr.bf16.mxu0 0
        %514 = vmatpush1.bf16.msra.mxu0 %v489
        %515 = vmatprep.subr.bf16.mxu0 0
        %516 = vmatpush1.bf16.msra.mxu0 %v488
        %517 = vmatprep.subr.bf16.mxu0 0
        %518 = vmatpush1.bf16.msra.mxu0 %v487
        %519 = vmatprep.subr.bf16.mxu0 0
        %520 = vmatpush2.bf16.msra.mxu0 0
        %521 = vmatprep.subr.bf16.mxu0 0
        %522 = vmatpush2.bf16.msra.mxu0 0
        %523 = vmatprep.subr.bf16.mxu0 0
        %524 = vmatpush2.bf16.msra.mxu0 0
        %525 = vmatprep.subr.bf16.mxu0 0
        %526 = vmatpush2.bf16.msra.mxu0 0
        %527 = vmatprep.subr.bf16.mxu0 0
        %528 = vmatpush2.bf16.msra.mxu0 0
        %529 = vmatprep.subr.bf16.mxu0 0
        %530 = vmatpush2.bf16.msra.mxu0 0
        %531 = vmatprep.subr.bf16.mxu0 0
        %532 = vmatpush2.bf16.msra.mxu0 0
        %533 = vmatprep.subr.bf16.mxu0 0
        %534 = vmatpush2.bf16.msra.mxu0 0
        %535 = vmatprep.mubr.bf16.mxu0 0
        %536 = vmatmul.mubr.bf16.gmra.mxu0 %v438
        %v537 = vpop.f32.mrf.mxu0
        %v538 = vadd.f32 0.0, %v537
        %v539 = vpop.f32.mrf.mxu0
        %v540 = vpop.f32.mrf.mxu0
        %v541 = vpop.f32.mrf.mxu0
        %542 = vdwg.mxu0
        %v543 = vld [vmem:[%s5] sm:$0xff]
        %v544 = vadd.f32 %v538, %v543
        %v545 = vpack.c.bf16 %v544, %v544
        %546 = vst.msk [vmem:[#allocation3] sm:$0xf] %vm433, %v545
        %v548 = vunpack.c.l.b16 %v545
        %v549 = vpack.c.b16 %v548, %v548
        %550 = vrot.lane.b32.xlu0 %v549, 96
        %v551 = vpop.permute.xlu0 %550
        %553 = vst.msk [vmem:[#allocation4] sm:$0xf] %vm433, %v551
        %v554 = vld [vmem:[#allocation2] sm:$0xf]
        %v555 = vld [vmem:[#allocation2 + $0x4] sm:$0xf]
        %v556 = vld [vmem:[#allocation2 + $0x8] sm:$0xf]
        %v557 = vld [vmem:[#allocation2 + $0xc] sm:$0xf]
        %v558 = vld [vmem:[#allocation3] sm:$0xf]
        %v563 = vunpack.c.l.b16 %v554
        %v564 = vunpack.c.l.b16 %v555
        %v565 = vunpack.c.l.b16 %v556
        %v566 = vunpack.c.l.b16 %v557
        %v567 = vpack.c.b16 %v564, %v563
        %v568 = vpack.c.b16 %v566, %v565
        %v570 = vsel %vm361, %v567, 0
        %v573 = vsel %vm361, %v568, 0
        %v576 = vsel %vm361, %v558, 0
        %578 = vmatprep.subr.bf16.mxu0 0
        %579 = vmatpush1.bf16.xpose.msra.mxu0 0
        %580 = vmatprep.subr.bf16.mxu0 0
        %581 = vmatpush1.bf16.xpose.msra.mxu0 0
        %582 = vmatprep.subr.bf16.mxu0 0
        %583 = vmatpush1.bf16.xpose.msra.mxu0 0
        %584 = vmatprep.subr.bf16.mxu0 0
        %585 = vmatpush1.bf16.xpose.msra.mxu0 0
        %586 = vmatprep.subr.bf16.mxu0 0
        %587 = vmatpush1.bf16.xpose.msra.mxu0 0
        %588 = vmatprep.subr.bf16.mxu0 0
        %589 = vmatpush1.bf16.xpose.msra.mxu0 0
        %590 = vmatprep.subr.bf16.mxu0 0
        %591 = vmatpush1.bf16.xpose.msra.mxu0 0
        %592 = vmatprep.subr.bf16.mxu0 0
        %593 = vmatpush1.bf16.xpose.msra.mxu0 %v576
        %594 = vmatprep.subr.bf16.mxu0 0
        %595 = vmatpush2.bf16.xpose.msra.mxu0 0
        %596 = vmatprep.subr.bf16.mxu0 0
        %597 = vmatpush2.bf16.xpose.msra.mxu0 0
        %598 = vmatprep.subr.bf16.mxu0 0
        %599 = vmatpush2.bf16.xpose.msra.mxu0 0
        %600 = vmatprep.subr.bf16.mxu0 0
        %601 = vmatpush2.bf16.xpose.msra.mxu0 0
        %602 = vmatprep.subr.bf16.mxu0 0
        %603 = vmatpush2.bf16.xpose.msra.mxu0 0
        %604 = vmatprep.subr.bf16.mxu0 0
        %605 = vmatpush2.bf16.xpose.msra.mxu0 0
        %606 = vmatprep.subr.bf16.mxu0 0
        %607 = vmatpush2.bf16.xpose.msra.mxu0 0
        %608 = vmatprep.subr.bf16.mxu0 0
        %609 = vmatpush2.bf16.xpose.msra.mxu0 0
        %610 = vmatprep.mubr.bf16.mxu0 0
        %611 = vmatmul.mubr.bf16.gmra.mxu0 %v570
        %v612 = vpop.f32.mrf.mxu0
        %v613 = vadd.f32 0.0, %v612
        %v614 = vpop.f32.mrf.mxu0
        %v615 = vpop.f32.mrf.mxu0
        %v616 = vadd.f32 0.0, %v615
        %v617 = vpop.f32.mrf.mxu0
        %618 = vmatprep.mubr.bf16.mxu0 0
        %619 = vmatmul.mubr.bf16.gmra.mxu0 %v573
        %v620 = vpop.f32.mrf.mxu0
        %v621 = vadd.f32 0.0, %v620
        %v622 = vpop.f32.mrf.mxu0
        %v623 = vpop.f32.mrf.mxu0
        %v624 = vadd.f32 0.0, %v623
        %v625 = vpop.f32.mrf.mxu0
        %626 = vdwg.mxu0
        %v627 = vlaneseq
        %v628 = vshrl.u32 %v627, 7
        %v629 = vadd.s32 %v628, 8
        %v630 = vadd.s32 %v628, 16
        %v631 = vadd.s32 %v628, 24
        %v632 = vlaneseq
        %v633 = vand.u32 %v632, 127
        %vm634 = vcmp.lt.s32.totalorder %v633, 4
        %vm635 = vcmp.le.s32.totalorder %v633, %v628
        %vm636 = vcmp.le.s32.totalorder %v633, %v629
        %vm637 = vcmp.le.s32.totalorder %v633, %v630
        %vm638 = vcmp.le.s32.totalorder %v633, %v631
        %vm639 = vmand %vm634, %vm635
        %vm640 = vmand %vm634, %vm636
        %vm641 = vmand %vm634, %vm637
        %vm642 = vmand %vm634, %vm638
        %v643 = vsel %vm639, %v613, -1e+30
        %v644 = vsel %vm640, %v616, -1e+30
        %v645 = vsel %vm641, %v621, -1e+30
        %v646 = vsel %vm642, %v624, -1e+30
        %vm647 = vcmask 64512
        %v648 = vsel %vm647, %v643, -inf
        %649 = vmax.xlane.f32.xlu0 %v648
        %v650 = vpop.xlane.xlu0 %649
        %v651 = vsel %vm647, %v644, -inf
        %652 = vmax.xlane.f32.xlu0 %v651
        %v653 = vpop.xlane.xlu0 %652
        %v654 = vsel %vm647, %v645, -inf
        %655 = vmax.xlane.f32.xlu0 %v654
        %v656 = vpop.xlane.xlu0 %655
        %v657 = vsel %vm647, %v646, -inf
        %658 = vmax.xlane.f32.xlu0 %v657
        %v659 = vpop.xlane.xlu0 %658
        %v660 = vsub.f32 %v643, %v650
        %v661 = vsub.f32 %v644, %v653
        %v662 = vsub.f32 %v645, %v656
        %v663 = vsub.f32 %v646, %v659
        %v664 = vmul.f32 %v660, 1.442695
        %v665 = vpow.pop %v664
        %v666 = vmul.f32 %v661, 1.442695
        %v667 = vpow.pop %v666
        %v668 = vmul.f32 %v662, 1.442695
        %v669 = vpow.pop %v668
        %v670 = vmul.f32 %v663, 1.442695
        %v671 = vpow.pop %v670
        %v672 = vsel %vm647, %v665, 0.0
        %673 = vadd.xlane.f32.xlu0 %v672
        %v674 = vpop.xlane.xlu0 %673
        %v675 = vsel %vm647, %v667, 0.0
        %676 = vadd.xlane.f32.xlu0 %v675
        %v677 = vpop.xlane.xlu0 %676
        %v678 = vsel %vm647, %v669, 0.0
        %679 = vadd.xlane.f32.xlu0 %v678
        %v680 = vpop.xlane.xlu0 %679
        %v681 = vsel %vm647, %v671, 0.0
        %682 = vadd.xlane.f32.xlu0 %v681
        %v683 = vpop.xlane.xlu0 %682
        %v684 = vrcp.pop %v674
        %v685 = vrcp.pop %v677
        %v686 = vrcp.pop %v680
        %v687 = vrcp.pop %v683
        %v688 = vmul.f32 %v665, %v684
        %v689 = vmul.f32 %v667, %v685
        %v690 = vmul.f32 %v669, %v686
        %v691 = vmul.f32 %v671, %v687
        %v692 = vpack.c.bf16 %v689, %v688
        %v693 = vpack.c.bf16 %v691, %v690
        %v694 = vld [vmem:[#allocation4] sm:$0xf]
        %v696 = vsel %vm647, %v692, 0
        %v699 = vsel %vm647, %v693, 0
        %vm701 = vcmask 1043456
        %v703 = vsel %vm701, %v694, 0
        %705 = vmatprep.subr.bf16.mxu0 0
        %706 = vmatpush1.bf16.msra.mxu0 0
        %707 = vmatprep.subr.bf16.mxu0 0
        %708 = vmatpush1.bf16.msra.mxu0 0
        %709 = vmatprep.subr.bf16.mxu0 0
        %710 = vmatpush1.bf16.msra.mxu0 0
        %711 = vmatprep.subr.bf16.mxu0 0
        %712 = vmatpush1.bf16.msra.mxu0 0
        %713 = vmatprep.subr.bf16.mxu0 0
        %714 = vmatpush1.bf16.msra.mxu0 0
        %715 = vmatprep.subr.bf16.mxu0 0
        %716 = vmatpush1.bf16.msra.mxu0 0
        %717 = vmatprep.subr.bf16.mxu0 0
        %718 = vmatpush1.bf16.msra.mxu0 0
        %719 = vmatprep.subr.bf16.mxu0 0
        %720 = vmatpush1.bf16.msra.mxu0 %v703
        %721 = vmatprep.subr.bf16.mxu0 0
        %722 = vmatpush2.bf16.msra.mxu0 0
        %723 = vmatprep.subr.bf16.mxu0 0
        %724 = vmatpush2.bf16.msra.mxu0 0
        %725 = vmatprep.subr.bf16.mxu0 0
        %726 = vmatpush2.bf16.msra.mxu0 0
        %727 = vmatprep.subr.bf16.mxu0 0
        %728 = vmatpush2.bf16.msra.mxu0 0
        %729 = vmatprep.subr.bf16.mxu0 0
        %730 = vmatpush2.bf16.msra.mxu0 0
        %731 = vmatprep.subr.bf16.mxu0 0
        %732 = vmatpush2.bf16.msra.mxu0 0
        %733 = vmatprep.subr.bf16.mxu0 0
        %734 = vmatpush2.bf16.msra.mxu0 0
        %735 = vmatprep.subr.bf16.mxu0 0
        %736 = vmatpush2.bf16.msra.mxu0 0
        %737 = vmatprep.mubr.bf16.mxu0 0
        %738 = vmatmul.mubr.bf16.gmra.mxu0 %v696
        %v739 = vpop.f32.mrf.mxu0
        %v740 = vadd.f32 0.0, %v739
        %v741 = vpop.f32.mrf.mxu0
        %v742 = vpop.f32.mrf.mxu0
        %v743 = vadd.f32 0.0, %v742
        %v744 = vpop.f32.mrf.mxu0
        %745 = vmatprep.mubr.bf16.mxu0 0
        %746 = vmatmul.mubr.bf16.gmra.mxu0 %v699
        %v747 = vpop.f32.mrf.mxu0
        %v748 = vadd.f32 0.0, %v747
        %v749 = vpop.f32.mrf.mxu0
        %v750 = vpop.f32.mrf.mxu0
        %v751 = vadd.f32 0.0, %v750
        %v752 = vpop.f32.mrf.mxu0
        %753 = vdwg.mxu0
        %v754 = vpack.c.bf16 %v743, %v740
        %v755 = vpack.c.bf16 %v751, %v748
        %v756 = vld [vmem:[%s6] sm:$0xf]
        %v757 = vld [vmem:[%s6 + $0x4] sm:$0xf]
        %v758 = vld [vmem:[%s6 + $0x8] sm:$0xf]
        %v759 = vld [vmem:[%s6 + $0xc] sm:$0xf]
        %v760 = vld [vmem:[%s7] sm:$0x1]
        %v762 = vlaneseq
        %v763 = vshrl.u32 %v762, 7
        %v764 = vsub.s32 0, %v763
        %v765 = vrot.slane %v760, %v764
        %v771 = vunpack.c.l.b16 %v756
        %v772 = vunpack.c.l.b16 %v757
        %v773 = vunpack.c.l.b16 %v758
        %v774 = vunpack.c.l.b16 %v759
        %v775 = vpack.c.b16 %v772, %v771
        %v776 = vpack.c.b16 %v774, %v773
        %v780 = vsel %vm361, %v754, 0
        %v783 = vsel %vm361, %v755, 0
        %785 = vmatprep.subr.bf16.mxu0 0
        %786 = vmatpush1.bf16.msra.mxu0 0
        %787 = vmatprep.subr.bf16.mxu0 0
        %788 = vmatpush1.bf16.msra.mxu0 0
        %789 = vmatprep.subr.bf16.mxu0 0
        %790 = vmatpush1.bf16.msra.mxu0 0
        %791 = vmatprep.subr.bf16.mxu0 0
        %792 = vmatpush1.bf16.msra.mxu0 0
        %793 = vmatprep.subr.bf16.mxu0 0
        %794 = vmatpush1.bf16.msra.mxu0 0
        %795 = vmatprep.subr.bf16.mxu0 0
        %796 = vmatpush1.bf16.msra.mxu0 0
        %797 = vmatprep.subr.bf16.mxu0 0
        %798 = vmatpush1.bf16.msra.mxu0 %v776
        %799 = vmatprep.subr.bf16.mxu0 0
        %800 = vmatpush1.bf16.msra.mxu0 %v775
        %801 = vmatprep.subr.bf16.mxu0 0
        %802 = vmatpush2.bf16.msra.mxu0 0
        %803 = vmatprep.subr.bf16.mxu0 0
        %804 = vmatpush2.bf16.msra.mxu0 0
        %805 = vmatprep.subr.bf16.mxu0 0
        %806 = vmatpush2.bf16.msra.mxu0 0
        %807 = vmatprep.subr.bf16.mxu0 0
        %808 = vmatpush2.bf16.msra.mxu0 0
        %809 = vmatprep.subr.bf16.mxu0 0
        %810 = vmatpush2.bf16.msra.mxu0 0
        %811 = vmatprep.subr.bf16.mxu0 0
        %812 = vmatpush2.bf16.msra.mxu0 0
        %813 = vmatprep.subr.bf16.mxu0 0
        %814 = vmatpush2.bf16.msra.mxu0 0
        %815 = vmatprep.subr.bf16.mxu0 0
        %816 = vmatpush2.bf16.msra.mxu0 0
        %817 = vmatprep.mubr.bf16.mxu0 0
        %818 = vmatmul.mubr.bf16.gmra.mxu0 %v780
        %v819 = vpop.f32.mrf.mxu0
        %v820 = vadd.f32 %v765, %v819
        %v821 = vpop.f32.mrf.mxu0
        %v822 = vpop.f32.mrf.mxu0
        %v823 = vadd.f32 %v765, %v822
        %v824 = vpop.f32.mrf.mxu0
        %825 = vmatprep.mubr.bf16.mxu0 0
        %826 = vmatmul.mubr.bf16.gmra.mxu0 %v783
        %v827 = vpop.f32.mrf.mxu0
        %v828 = vadd.f32 %v765, %v827
        %v829 = vpop.f32.mrf.mxu0
        %v830 = vpop.f32.mrf.mxu0
        %v831 = vadd.f32 %v765, %v830
        %v832 = vpop.f32.mrf.mxu0
        %833 = vdwg.mxu0
        %834 = vst.msk [vmem:[%s312] sm:$0xff] %vm361, %v820
        %835 = vst.msk [vmem:[%s312 + $0x8] sm:$0xff] %vm361, %v823
        %836 = vst.msk [vmem:[%s312 + $0x10] sm:$0xff] %vm361, %v828
        %837 = vst.msk [vmem:[%s312 + $0x18] sm:$0xff] %vm361, %v831
        %s838 = sand.u32 %s208, 1
        %s839 = scalar_lea.sflag [#allocation6], %s838
        %s840 = sand.u32 %s208, 1
        %s841 = smul.addr %s840, 32
        %s842 = scalar_lea.vmem [#allocation5], %s841
        // Predicated region
        $region53: #{tpu_custom_call.1} parent=51 // pred_check
          %p843 = pneg %p218
        $region54: #{tpu_custom_call.1} parent=51 // pred_check_branch
          %845 = sbr.rel (%p843) target = $region56
        $region55: #{tpu_custom_call.1} parent=51 // pred_region
          %s847 = ssub.s32 512, 512
          %848 = vsyncadd %s839, %s847
          %s849 = smul.addr %s22, 4
          %s850 = smul.addr %s849, 128
          %s851 = scalar_lea.hbm %s8, %s850
          %s852 = sshll.u32 %s842, 4
          %s853 = int_to_ptr.vmem [resolvable:$true] %s852
          %858 = dma.vmem_to_hbm [thread:$0]  %s853, 512, %s851, %s839, 128, 128, 8
        $region56: #{tpu_custom_call.1} parent=51 // pred_fallthru
          _
      $region52: #{tpu_custom_call.1} parent=5 // pred_fallthru
        _
      %p859 = scmp.le.s32.totalorder 2, %s17
      // Predicated region
      $region57: #{tpu_custom_call.1} parent=5 // pred_check
        %p860 = pneg %p859
      $region58: #{tpu_custom_call.1} parent=5 // pred_check_branch
        %862 = sbr.rel (%p860) target = $region60
      $region59: #{tpu_custom_call.1} parent=5 // pred_region
        %s863 = ssub.s32 %s17, 2
        // Predicated region
        $region61: #{tpu_custom_call.1} parent=59 // pred_check
          %p864 = pneg %p224
        $region62: #{tpu_custom_call.1} parent=59 // pred_check_branch
          %866 = sbr.rel (%p864) target = $region64
        $region63: #{tpu_custom_call.1} parent=59 // pred_region
          %s867 = sand.u32 %s209, 1
          %s868 = scalar_lea.sflag [#allocation6], %s867
          %s869 = sand.u32 %s209, 1
          %s870 = smul.addr %s869, 32
          %s871 = scalar_lea.vmem [#allocation5], %s870
          %872 = dma.done %s868, 512
        $region64: #{tpu_custom_call.1} parent=59 // pred_fallthru
          _
      $region60: #{tpu_custom_call.1} parent=5 // pred_fallthru
        _
    $region6: #{tpu_custom_call.1} parent=1 // loop_footer
      %s21 = sadd.s32 1, %s17
    $region7: #{tpu_custom_call.1} parent=1 // loop_footer_branch
      %16 = sbr.rel target = $region3
    $region8: #{tpu_custom_call.1} parent=1 // loop_exit
      _
    %873 = vsyncpa [#allocation6], 1
    %s874 = scalar_lea.sflag [#allocation6], 1
    %875 = vsyncpa %s874, 1

</llo_original>
